<compile_context>
chip_gen: v5e
topology: v5e:2x2
jax: 0.10.0
libtpu: 0.0.40
codegen_flags: <defaults>
</compile_context>

<pallas_src>
import functools

import jax
import jax.numpy as jnp
from jax.experimental import pallas as pl
from jax.experimental.pallas import tpu as pltpu


def _conv1d_kernel(x_ref, halo_ref, w_ref, b_ref, o_ref, y_ref, *,
                   K, pad, tT, bb, C_out):
    # x_ref   : (bb, tT, C_in)          bb independent time tiles
    # halo_ref: (bb, 2*pad, C_in)       [left halo rows ; right halo rows] per tile
    # w_ref   : (C_in, K*C_out)         per-tap matrices stacked along columns
    # b_ref   : (1, 1, C_out) f32
    # o_ref   : (bb, tT, C_out)
    # y_ref   : VMEM (bb, tT, K*C_out) f32 scratch: per-tap matmul results
    C_in = x_ref.shape[-1]

    # One wide MXU matmul covering all K taps (fills the 256-wide MXU on
    # v6e/v7x and reuses the LHS once instead of K times).
    x2 = x_ref[...].reshape(bb * tT, C_in)
    y = jnp.dot(x2, w_ref[...], preferred_element_type=jnp.float32)
    y_ref[...] = y.reshape(bb, tT, K * C_out)

    b = b_ref[...].astype(jnp.float32)                       # (1, 1, C_out)

    # Interior rows [pad, tT - pad): every tap reads in-tile rows.  The K column
    # groups are combined with shifted reads of the f32 scratch, summed as
    # values (no accumulator RMW, no VMEM slab of the input).
    n_int = tT - 2 * pad
    if n_int > 0:
        acc = b + y_ref[:, 0:n_int, 0:C_out]
        for k in range(1, K):
            acc = acc + y_ref[:, k:k + n_int, k * C_out:(k + 1) * C_out]
        o_ref[:, pad:tT - pad, :] = acc.astype(o_ref.dtype)

    # The 2*pad boundary rows: in-tile taps read the scratch, out-of-tile taps
    # use tiny (bb, C_in) @ (C_in, C_out) dots on the halo rows ('same' zero
    # padding at the sequence ends is already baked into the halo side input).
    for i in list(range(pad)) + list(range(tT - pad, tT)):
        row = b
        for k in range(K):
            src = i + k - pad
            if 0 <= src < tT:
                row = row + y_ref[:, src:src + 1, k * C_out:(k + 1) * C_out]
            else:
                hrow = i + k if src < 0 else i + k - tT
                h = halo_ref[:, hrow, :]                      # (bb, C_in)
                wk = w_ref[:, k * C_out:(k + 1) * C_out]      # (C_in, C_out)
                row = row + jnp.dot(
                    h, wk, preferred_element_type=jnp.float32)[:, None, :]
        o_ref[:, i:i + 1, :] = row.astype(o_ref.dtype)


def _sublane_multiple(dtype):
    # rows per vreg sublane group: 8 for 32-bit, 16 for bf16, 32 for int8/fp8.
    return max(8, 32 // jnp.dtype(dtype).itemsize)


def _pick_time_tile(T, block_t, sub):
    """Largest multiple of `sub` that is <= block_t and divides T; else T."""
    best = None
    for cand in range(sub, min(block_t, T) + 1, sub):
        if T % cand == 0:
            best = cand
    return best if best is not None else T


def _pick_batch_block(G, per_tile_hbm, per_tile_vmem, const_vmem,
                      target_hbm=1 << 20, vmem_budget=16 << 20):
    """Pack `bb` tiles per grid step so each step moves ~target_hbm bytes."""
    best = 1
    for cand in range(1, G + 1):
        if G % cand:
            continue
        if const_vmem + cand * per_tile_vmem > vmem_budget:
            break
        best = cand
        if cand * per_tile_hbm >= target_hbm:
            break
    return best


def _vmem_capacity_bytes():
    try:
        cap = getattr(pltpu.get_tpu_info(), "vmem_capacity_bytes", None)
        if cap:
            return int(cap)
    except Exception:
        pass
    return 64 * 1024 * 1024          # v7x floor; v5e/v6e have 128 MiB


@functools.partial(jax.jit, static_argnames=("kernel_size", "block_t"))
def conv_layer_forward(x, weight, bias, *, kernel_size=3, block_t=512):
    """'same' Conv1d over time, channels-last (ConvLayer.forward).

    x      : (B, T, C_in)
    weight : (K, C_in, C_out)  == torch Conv1d weight.permute(2, 1, 0)
    bias   : (C_out,)          kept in f32 internally regardless of dtype
    Returns (B, T, C_out) in x.dtype.
    """
    B, T, C_in = x.shape
    K, wc_in, C_out = weight.shape
    if K != kernel_size:
        raise ValueError("weight kernel dim does not match kernel_size")
    if wc_in != C_in:
        raise ValueError("weight C_in does not match input channels")
    if kernel_size % 2 != 1 or kernel_size < 3:
        # TODO(synk): even kernel_size, K==1 (pointwise), stride != 1 and
        # dilation != 1 are not implemented; the module default is K=3/stride 1.
        raise NotImplementedError("only odd kernel_size >= 3, stride=1 supported")
    pad = (kernel_size - 1) // 2

    in_sz = jnp.dtype(x.dtype).itemsize
    w_sz = jnp.dtype(weight.dtype).itemsize
    out_dtype = x.dtype
    out_sz = jnp.dtype(out_dtype).itemsize

    sub = _sublane_multiple(x.dtype)
    tT = _pick_time_tile(T, block_t, sub)
    if 2 * pad > tT:
        raise ValueError(f"time tile {tT} too small for kernel_size {K} "
                         "(need tT >= kernel_size - 1)")
    n_t = T // tT
    G = B * n_t

    # Batch-block: pack several (batch, time-tile) slices per grid step so a
    # step moves a healthy amount of HBM traffic, within a VMEM budget.
    per_tile_hbm = tT * (C_in * in_sz + C_out * out_sz) + 2 * pad * C_in * in_sz
    per_tile_vmem = (2 * tT * C_in * in_sz            # x tiles (double buffered)
                     + 2 * 2 * pad * C_in * in_sz     # halo tiles
                     + 2 * tT * C_out * out_sz        # output tiles
                     + tT * K * C_out * 4)            # f32 y scratch
    const_vmem = 2 * C_in * K * C_out * w_sz + 2 * C_out * 4
    bb = _pick_batch_block(G, per_tile_hbm, per_tile_vmem, const_vmem)
    if tT % sub != 0:
        bb = 1                      # keep in-kernel leading-dim reshapes trivial

    # Free reshape of the time axis into tiles, flattened with batch.
    xr = x.reshape(B, n_t, tT, C_in)
    x_flat = xr.reshape(G, tT, C_in)

    # Halo rows per tile: left = last `pad` rows of the previous tile, right =
    # first `pad` rows of the next tile; zeros at the sequence ends (exactly the
    # 'same' zero padding).  Built inside this jit, so it fuses with the rest of
    # the program instead of costing extra dispatches.
    zrow = jnp.zeros((B, 1, pad, C_in), x.dtype)
    left = jnp.concatenate([zrow, xr[:, :-1, tT - pad:, :]], axis=1)
    right = jnp.concatenate([xr[:, 1:, :pad, :], zrow], axis=1)
    halo = jnp.concatenate([left, right], axis=2).reshape(G, 2 * pad, C_in)

    # Per-tap matrices stacked along columns: group k = columns [k*C_out, (k+1)*C_out).
    w_stack = jnp.transpose(weight, (1, 0, 2)).reshape(C_in, K * C_out)
    bias_f32 = bias.astype(jnp.float32).reshape(1, 1, C_out)

    # Generation-aware VMEM limit (v5e/v6e: 128 MiB, v7x: 64 MiB physical).
    vmem_need = const_vmem + bb * per_tile_vmem
    cap = _vmem_capacity_bytes()
    vmem_limit = int(min(max(2 * vmem_need + (4 << 20), 32 * 1024 * 1024),
                         int(0.85 * cap)))

    kernel = functools.partial(_conv1d_kernel, K=K, pad=pad, tT=tT, bb=bb,
                               C_out=C_out)

    out = pl.pallas_call(
        kernel,
        out_shape=jax.ShapeDtypeStruct((G, tT, C_out), out_dtype),
        grid_spec=pltpu.PrefetchScalarGridSpec(
            num_scalar_prefetch=0,
            grid=(G // bb,),
            in_specs=[
                pl.BlockSpec((bb, tT, C_in), lambda g: (g, 0, 0)),
                pl.BlockSpec((bb, 2 * pad, C_in), lambda g: (g, 0, 0)),
                # Grid-invariant weight/bias blocks (kept default-buffered; with
                # K=3 / C<=512 their VMEM footprint is negligible).
                pl.BlockSpec((C_in, K * C_out), lambda g: (0, 0)),
                pl.BlockSpec((1, 1, C_out), lambda g: (0, 0, 0)),
            ],
            out_specs=pl.BlockSpec((bb, tT, C_out), lambda g: (g, 0, 0)),
            scratch_shapes=[
                pltpu.VMEM((bb, tT, K * C_out), jnp.float32),
            ],
        ),
        compiler_params=pltpu.CompilerParams(
            dimension_semantics=("parallel",),
            vmem_limit_bytes=vmem_limit,
        ),
        cost_estimate=pl.CostEstimate(
            flops=2 * B * T * K * C_in * C_out,
            transcendentals=0,
            bytes_accessed=(B * T * C_in * in_sz
                            + G * 2 * pad * C_in * in_sz
                            + C_in * K * C_out * w_sz
                            + C_out * 4
                            + B * T * C_out * out_sz),
        ),
    )(x_flat, halo, w_stack, bias_f32)

    return out.reshape(B, T, C_out)


def _reference_conv(x, weight, bias):
    # XLA reference of the same 'same'-padded Conv1d (cross-correlation), f32.
    out = jax.lax.conv_general_dilated(
        x, weight,
        window_strides=(1,),
        padding="SAME",
        dimension_numbers=("NWC", "WIO", "NWC"),
        precision=jax.lax.Precision.HIGHEST,
    )
    return out + bias[None, None, :]


if __name__ == "__main__":
    # Lane-dense channels (multiples of 128); default tiling packs everything
    # into one fat grid step, the forced small-block run exercises the
    # inter-tile halo path.
    B, T = 2, 256
    C_in, C_out, K = 128, 128, 3

    key = jax.random.PRNGKey(0)
    kx, kw, kb = jax.random.split(key, 3)

    x = jax.random.normal(kx, (B, T, C_in), dtype=jnp.float32)

    # Deterministic init mimicking nn.Conv1d: U(-sqrt(1/(C_in*K)), +sqrt(1/(C_in*K))).
    # Torch weight layout is (C_out, C_in, K); this kernel takes per-tap matrices
    # (K, C_in, C_out), i.e. torch_weight.permute(2, 1, 0).
    bound = (1.0 / (C_in * K)) ** 0.5
    weight = jax.random.uniform(kw, (K, C_in, C_out), minval=-bound, maxval=bound,
                                dtype=jnp.float32)
    bias = jax.random.uniform(kb, (C_out,), minval=-bound, maxval=bound,
                              dtype=jnp.float32)

    ref = _reference_conv(x, weight, bias)

    # f32 path, default (large) tiles.
    out = jax.block_until_ready(conv_layer_forward(x, weight, bias, kernel_size=K))
    assert out.shape == (B, T, C_out)
    assert jnp.allclose(out, ref, atol=1e-4, rtol=1e-4), "f32 mismatch vs reference"

    # f32 path, forced small time tiles: exercises halo handoff between tiles
    # (correctness coverage; the default call above is the perf configuration).
    out_tiled = jax.block_until_ready(
        conv_layer_forward(x, weight, bias, kernel_size=K, block_t=64))
    assert jnp.allclose(out_tiled, ref, atol=1e-4, rtol=1e-4), \
        "tiled f32 mismatch vs reference"

    # bf16 activations/weights (full-rate MXU, halved HBM traffic on v6e/v7x);
    # bias and accumulation stay f32 inside the kernel.
    out_bf16 = jax.block_until_ready(
        conv_layer_forward(x.astype(jnp.bfloat16), weight.astype(jnp.bfloat16),
                           bias, kernel_size=K))
    assert out_bf16.dtype == jnp.bfloat16
    assert jnp.allclose(out_bf16.astype(jnp.float32), ref,
                        atol=5e-2, rtol=5e-2), "bf16 mismatch vs reference"

    print("KERNEL_OK")
</pallas_src>

<mosaic_0001>
module attributes {stable_mosaic.version = 11 : i64} {
  func.func @_conv1d_kernel(%arg0: i32, %arg1: memref<2x256x128xf32, #tpu.memory_space<vmem>>, %arg2: memref<2x2x128xf32, #tpu.memory_space<vmem>>, %arg3: memref<128x384xf32, #tpu.memory_space<vmem>>, %arg4: memref<1x1x128xf32, #tpu.memory_space<vmem>>, %arg5: memref<2x256x128xf32, #tpu.memory_space<vmem>>, %arg6: memref<2x256x384xf32, #tpu.memory_space<vmem>>) attributes {dimension_semantics = [#tpu.dimension_semantics<parallel>], iteration_bounds = array<i64: 1>, scalar_prefetch = 0 : i64, scratch_operands = 1 : i64, tpu.core_type = #tpu.core_type<tc>, window_params = [{transform_indices = @transform_0, window_bounds = array<i64: 2, 256, 128>}, {transform_indices = @transform_1, window_bounds = array<i64: 2, 2, 128>}, {pipeline_mode = #tpu.pipeline_mode<synchronous>, transform_indices = @transform_2, window_bounds = array<i64: 128, 384>}, {pipeline_mode = #tpu.pipeline_mode<synchronous>, transform_indices = @transform_3, window_bounds = array<i64: 1, 1, 128>}, {transform_indices = @transform_4, window_bounds = array<i64: 2, 256, 128>}]} {
    %c0 = arith.constant 0 : index
    %c0_0 = arith.constant 0 : index
    %c0_1 = arith.constant 0 : index
    %0 = vector.load %arg1[%c0, %c0_0, %c0_1] : memref<2x256x128xf32, #tpu.memory_space<vmem>>, vector<2x256x128xf32>
    %1 = vector.shape_cast %0 : vector<2x256x128xf32> to vector<512x128xf32>
    %c0_2 = arith.constant 0 : index
    %c0_3 = arith.constant 0 : index
    %2 = vector.load %arg3[%c0_2, %c0_3] : memref<128x384xf32, #tpu.memory_space<vmem>>, vector<128x384xf32>
    %cst = arith.constant dense<0.000000e+00> : vector<512x384xf32>
    %3 = tpu.matmul %1, %2, %cst {dimension_numbers = #tpu.dot_dimension_numbers<[1], [0], [0], [1], [0, 0, 1, 1], [], []>} : vector<512x128xf32>, vector<128x384xf32>, vector<512x384xf32> -> vector<512x384xf32>
    %4 = vector.shape_cast %3 : vector<512x384xf32> to vector<2x256x384xf32>
    %c0_4 = arith.constant 0 : index
    %c0_5 = arith.constant 0 : index
    %c0_6 = arith.constant 0 : index
    %5 = vector.load %arg6[%c0_4, %c0_5, %c0_6] : memref<2x256x384xf32, #tpu.memory_space<vmem>>, vector<2x256x384xf32>
    tpu.vector_store %arg6[%c0_4, %c0_5, %c0_6], %4 {strides = array<i32>} : memref<2x256x384xf32, #tpu.memory_space<vmem>>, vector<2x256x384xf32>,
    %c0_7 = arith.constant 0 : index
    %c0_8 = arith.constant 0 : index
    %c0_9 = arith.constant 0 : index
    %6 = vector.load %arg4[%c0_7, %c0_8, %c0_9] : memref<1x1x128xf32, #tpu.memory_space<vmem>>, vector<1x1x128xf32>
    %c0_10 = arith.constant 0 : index
    %c0_11 = arith.constant 0 : index
    %c0_12 = arith.constant 0 : index
    %7 = vector.load %arg6[%c0_10, %c0_11, %c0_12] : memref<2x256x384xf32, #tpu.memory_space<vmem>>, vector<2x254x128xf32>
    %8 = vector.broadcast %6 : vector<1x1x128xf32> to vector<2x254x128xf32>
    %9 = arith.addf %8, %7 : vector<2x254x128xf32>
    %c0_13 = arith.constant 0 : index
    %c1 = arith.constant 1 : index
    %c128 = arith.constant 128 : index
    %10 = vector.load %arg6[%c0_13, %c1, %c128] : memref<2x256x384xf32, #tpu.memory_space<vmem>>, vector<2x254x128xf32>
    %11 = arith.addf %9, %10 : vector<2x254x128xf32>
    %c0_14 = arith.constant 0 : index
    %c2 = arith.constant 2 : index
    %c256 = arith.constant 256 : index
    %12 = vector.load %arg6[%c0_14, %c2, %c256] : memref<2x256x384xf32, #tpu.memory_space<vmem>>, vector<2x254x128xf32>
    %13 = arith.addf %11, %12 : vector<2x254x128xf32>
    %c0_15 = arith.constant 0 : index
    %c1_16 = arith.constant 1 : index
    %c0_17 = arith.constant 0 : index
    %14 = vector.load %arg5[%c0_15, %c1_16, %c0_17] : memref<2x256x128xf32, #tpu.memory_space<vmem>>, vector<2x254x128xf32>
    tpu.vector_store %arg5[%c0_15, %c1_16, %c0_17], %13 {strides = array<i32>} : memref<2x256x128xf32, #tpu.memory_space<vmem>>, vector<2x254x128xf32>,
    %c0_18 = arith.constant 0 : index
    %c0_19 = arith.constant 0 : index
    %c0_20 = arith.constant 0 : index
    %15 = vector.load %arg2[%c0_18, %c0_19, %c0_20] : memref<2x2x128xf32, #tpu.memory_space<vmem>>, vector<2x1x128xf32>
    %16 = vector.shape_cast %15 : vector<2x1x128xf32> to vector<2x128xf32>
    %c0_21 = arith.constant 0 : index
    %c0_22 = arith.constant 0 : index
    %17 = vector.load %arg3[%c0_21, %c0_22] : memref<128x384xf32, #tpu.memory_space<vmem>>, vector<128x128xf32>
    %cst_23 = arith.constant dense<0.000000e+00> : vector<2x128xf32>
    %18 = tpu.matmul %16, %17, %cst_23 {dimension_numbers = #tpu.dot_dimension_numbers<[1], [0], [0], [1], [0, 0, 1, 1], [], []>} : vector<2x128xf32>, vector<128x128xf32>, vector<2x128xf32> -> vector<2x128xf32>
    %19 = vector.shape_cast %18 : vector<2x128xf32> to vector<2x1x128xf32>
    %20 = vector.broadcast %6 : vector<1x1x128xf32> to vector<2x1x128xf32>
    %21 = arith.addf %20, %19 : vector<2x1x128xf32>
    %c0_24 = arith.constant 0 : index
    %c0_25 = arith.constant 0 : index
    %c128_26 = arith.constant 128 : index
    %22 = vector.load %arg6[%c0_24, %c0_25, %c128_26] : memref<2x256x384xf32, #tpu.memory_space<vmem>>, vector<2x1x128xf32>
    %23 = arith.addf %21, %22 : vector<2x1x128xf32>
    %c0_27 = arith.constant 0 : index
    %c1_28 = arith.constant 1 : index
    %c256_29 = arith.constant 256 : index
    %24 = vector.load %arg6[%c0_27, %c1_28, %c256_29] : memref<2x256x384xf32, #tpu.memory_space<vmem>>, vector<2x1x128xf32>
    %25 = arith.addf %23, %24 : vector<2x1x128xf32>
    %c0_30 = arith.constant 0 : index
    %c0_31 = arith.constant 0 : index
    %c0_32 = arith.constant 0 : index
    %26 = vector.load %arg5[%c0_30, %c0_31, %c0_32] : memref<2x256x128xf32, #tpu.memory_space<vmem>>, vector<2x1x128xf32>
    tpu.vector_store %arg5[%c0_30, %c0_31, %c0_32], %25 {strides = array<i32>} : memref<2x256x128xf32, #tpu.memory_space<vmem>>, vector<2x1x128xf32>,
    %c0_33 = arith.constant 0 : index
    %c254 = arith.constant 254 : index
    %c0_34 = arith.constant 0 : index
    %27 = vector.load %arg6[%c0_33, %c254, %c0_34] : memref<2x256x384xf32, #tpu.memory_space<vmem>>, vector<2x1x128xf32>
    %28 = vector.broadcast %6 : vector<1x1x128xf32> to vector<2x1x128xf32>
    %29 = arith.addf %28, %27 : vector<2x1x128xf32>
    %c0_35 = arith.constant 0 : index
    %c255 = arith.constant 255 : index
    %c128_36 = arith.constant 128 : index
    %30 = vector.load %arg6[%c0_35, %c255, %c128_36] : memref<2x256x384xf32, #tpu.memory_space<vmem>>, vector<2x1x128xf32>
    %31 = arith.addf %29, %30 : vector<2x1x128xf32>
    %c0_37 = arith.constant 0 : index
    %c1_38 = arith.constant 1 : index
    %c0_39 = arith.constant 0 : index
    %32 = vector.load %arg2[%c0_37, %c1_38, %c0_39] : memref<2x2x128xf32, #tpu.memory_space<vmem>>, vector<2x1x128xf32>
    %33 = vector.shape_cast %32 : vector<2x1x128xf32> to vector<2x128xf32>
    %c0_40 = arith.constant 0 : index
    %c256_41 = arith.constant 256 : index
    %34 = vector.load %arg3[%c0_40, %c256_41] : memref<128x384xf32, #tpu.memory_space<vmem>>, vector<128x128xf32>
    %cst_42 = arith.constant dense<0.000000e+00> : vector<2x128xf32>
    %35 = tpu.matmul %33, %34, %cst_42 {dimension_numbers = #tpu.dot_dimension_numbers<[1], [0], [0], [1], [0, 0, 1, 1], [], []>} : vector<2x128xf32>, vector<128x128xf32>, vector<2x128xf32> -> vector<2x128xf32>
    %36 = vector.shape_cast %35 : vector<2x128xf32> to vector<2x1x128xf32>
    %37 = arith.addf %31, %36 : vector<2x1x128xf32>
    %c0_43 = arith.constant 0 : index
    %c255_44 = arith.constant 255 : index
    %c0_45 = arith.constant 0 : index
    %38 = vector.load %arg5[%c0_43, %c255_44, %c0_45] : memref<2x256x128xf32, #tpu.memory_space<vmem>>, vector<2x1x128xf32>
    tpu.vector_store %arg5[%c0_43, %c255_44, %c0_45], %37 {strides = array<i32>} : memref<2x256x128xf32, #tpu.memory_space<vmem>>, vector<2x1x128xf32>,
    return
  }
  func.func @transform_0(%arg0: i32) -> (i32, i32, i32) {
    %c0_i32 = arith.constant 0 : i32
    %c0_i32_0 = arith.constant 0 : i32
    %c0_i32_1 = arith.constant 0 : i32
    return %arg0, %c0_i32, %c0_i32_0 : i32, i32, i32
  }
  func.func @transform_1(%arg0: i32) -> (i32, i32, i32) {
    %c0_i32 = arith.constant 0 : i32
    %c0_i32_0 = arith.constant 0 : i32
    %c0_i32_1 = arith.constant 0 : i32
    return %arg0, %c0_i32, %c0_i32_0 : i32, i32, i32
  }
  func.func @transform_2(%arg0: i32) -> (i32, i32) {
    %c0_i32 = arith.constant 0 : i32
    %c0_i32_0 = arith.constant 0 : i32
    %c0_i32_1 = arith.constant 0 : i32
    return %c0_i32, %c0_i32_0 : i32, i32
  }
  func.func @transform_3(%arg0: i32) -> (i32, i32, i32) {
    %c0_i32 = arith.constant 0 : i32
    %c0_i32_0 = arith.constant 0 : i32
    %c0_i32_1 = arith.constant 0 : i32
    %c0_i32_2 = arith.constant 0 : i32
    return %c0_i32, %c0_i32_0, %c0_i32_1 : i32, i32, i32
  }
  func.func @transform_4(%arg0: i32) -> (i32, i32, i32) {
    %c0_i32 = arith.constant 0 : i32
    %c0_i32_0 = arith.constant 0 : i32
    %c0_i32_1 = arith.constant 0 : i32
    return %arg0, %c0_i32, %c0_i32_0 : i32, i32, i32
  }
}

</mosaic_0001>

<llo_original>
// kernel: conv_layer_forward.1
$region0: #{conv_layer_forward.1}
  #allocation0 [shape = 'u32[]', space=smem, size = 0x4, offset = 0x4, fixed_abs, tag = 'smem constant byte address 0x4 - core index']
  #allocation1 [shape = 'u32[72,128]{1,0:T(1,128)}', space=vmem, size = 0x9000, scoped, tag = 'internal scratch']
  #allocation2 [shape = 'f32[2,256,384]{2,1,0:T(8,128)}', space=vmem, size = 0xc0000, scoped, tag = 'scratch operand']
  %s0 = inlined_call_operand.vmem [shape: f32[2,256,128], index: 0, kind: input, shape index: {}]
  %s1 = inlined_call_operand.vmem [shape: f32[2,2,128], index: 1, kind: input, shape index: {}]
  %s2 = inlined_call_operand.vmem [shape: f32[128,384], index: 2, kind: input, shape index: {}]
  %s3 = inlined_call_operand.vmem [shape: f32[1,1,128], index: 3, kind: input, shape index: {}]
  %s4 = inlined_call_operand.hbm [shape: f32[2,256,128], index: 4, kind: output, shape index: {}]
  %s5 = sld [smem:[#allocation0]]
  $region26: #{conv_layer_forward.1} parent=0
    _
  %s7 = ssub.s32 1, %s5
  %s8 = scalar_select 0, %s7, %s5
  $region1: #{conv_layer_forward.1} parent=0
    #allocation3 [shape = 'u8[262144]{0}', space=vmem, size = 0x40000, scoped, tag = 'output window, operand 0, single buffered']
    #allocation4 [shape = 's32[1]{0}', space=sflag, size = 0x4, scoped, tag = 'scoped memory for conv_layer_forward.1']
    %9 = vsyncpa [#allocation4], 0
    // Predicated region
    $region2: #{conv_layer_forward.1} parent=1 // pred_check
      _
    $region3: #{conv_layer_forward.1} parent=1 // pred_check_branch
      %11 = sbr.rel (0) target = $region5
    $region4: #{conv_layer_forward.1} parent=1 // pred_region
      _
    $region5: #{conv_layer_forward.1} parent=1 // pred_fallthru
      _
    // Predicated region
    $region6: #{conv_layer_forward.1} parent=1 // pred_check
      _
    $region7: #{conv_layer_forward.1} parent=1 // pred_check_branch
      %13 = sbr.rel (0) target = $region9
    $region8: #{conv_layer_forward.1} parent=1 // pred_region
      _
    $region9: #{conv_layer_forward.1} parent=1 // pred_fallthru
      _
    // Predicated region
    $region10: #{conv_layer_forward.1} parent=1 // pred_check
      _
    $region11: #{conv_layer_forward.1} parent=1 // pred_check_branch
      %15 = sbr.rel (0) target = $region13
    $region12: #{conv_layer_forward.1} parent=1 // pred_region
      _
    $region13: #{conv_layer_forward.1} parent=1 // pred_fallthru
      _
    // Predicated region
    $region14: #{conv_layer_forward.1} parent=1 // pred_check
      _
    $region15: #{conv_layer_forward.1} parent=1 // pred_check_branch
      %17 = sbr.rel (0) target = $region17
    $region16: #{conv_layer_forward.1} parent=1 // pred_region
      _
    $region17: #{conv_layer_forward.1} parent=1 // pred_fallthru
      _
    %v18 = vld [vmem:[%s0] sm:$0xff]
    %v19 = vld [vmem:[%s0 + $0x8] sm:$0xff]
    %v20 = vld [vmem:[%s0 + $0x10] sm:$0xff]
    %v21 = vld [vmem:[%s0 + $0x18] sm:$0xff]
    %v22 = vld [vmem:[%s0 + $0x20] sm:$0xff]
    %v23 = vld [vmem:[%s0 + $0x28] sm:$0xff]
    %v24 = vld [vmem:[%s0 + $0x30] sm:$0xff]
    %v25 = vld [vmem:[%s0 + $0x38] sm:$0xff]
    %v26 = vld [vmem:[%s0 + $0x40] sm:$0xff]
    %v27 = vld [vmem:[%s0 + $0x48] sm:$0xff]
    %v28 = vld [vmem:[%s0 + $0x50] sm:$0xff]
    %v29 = vld [vmem:[%s0 + $0x58] sm:$0xff]
    %v30 = vld [vmem:[%s0 + $0x60] sm:$0xff]
    %v31 = vld [vmem:[%s0 + $0x68] sm:$0xff]
    %v32 = vld [vmem:[%s0 + $0x70] sm:$0xff]
    %v33 = vld [vmem:[%s0 + $0x78] sm:$0xff]
    %v34 = vld [vmem:[%s0 + $0x80] sm:$0xff]
    %v35 = vld [vmem:[%s0 + $0x88] sm:$0xff]
    %v36 = vld [vmem:[%s0 + $0x90] sm:$0xff]
    %v37 = vld [vmem:[%s0 + $0x98] sm:$0xff]
    %v38 = vld [vmem:[%s0 + $0xa0] sm:$0xff]
    %v39 = vld [vmem:[%s0 + $0xa8] sm:$0xff]
    %v40 = vld [vmem:[%s0 + $0xb0] sm:$0xff]
    %v41 = vld [vmem:[%s0 + $0xb8] sm:$0xff]
    %v42 = vld [vmem:[%s0 + $0xc0] sm:$0xff]
    %v43 = vld [vmem:[%s0 + $0xc8] sm:$0xff]
    %v44 = vld [vmem:[%s0 + $0xd0] sm:$0xff]
    %v45 = vld [vmem:[%s0 + $0xd8] sm:$0xff]
    %v46 = vld [vmem:[%s0 + $0xe0] sm:$0xff]
    %v47 = vld [vmem:[%s0 + $0xe8] sm:$0xff]
    %v48 = vld [vmem:[%s0 + $0xf0] sm:$0xff]
    %v49 = vld [vmem:[%s0 + $0xf8] sm:$0xff]
    %v50 = vld [vmem:[%s0 + $0x100] sm:$0xff]
    %v51 = vld [vmem:[%s0 + $0x108] sm:$0xff]
    %v52 = vld [vmem:[%s0 + $0x110] sm:$0xff]
    %v53 = vld [vmem:[%s0 + $0x118] sm:$0xff]
    %v54 = vld [vmem:[%s0 + $0x120] sm:$0xff]
    %v55 = vld [vmem:[%s0 + $0x128] sm:$0xff]
    %v56 = vld [vmem:[%s0 + $0x130] sm:$0xff]
    %v57 = vld [vmem:[%s0 + $0x138] sm:$0xff]
    %v58 = vld [vmem:[%s0 + $0x140] sm:$0xff]
    %v59 = vld [vmem:[%s0 + $0x148] sm:$0xff]
    %v60 = vld [vmem:[%s0 + $0x150] sm:$0xff]
    %v61 = vld [vmem:[%s0 + $0x158] sm:$0xff]
    %v62 = vld [vmem:[%s0 + $0x160] sm:$0xff]
    %v63 = vld [vmem:[%s0 + $0x168] sm:$0xff]
    %v64 = vld [vmem:[%s0 + $0x170] sm:$0xff]
    %v65 = vld [vmem:[%s0 + $0x178] sm:$0xff]
    %v66 = vld [vmem:[%s0 + $0x180] sm:$0xff]
    %v67 = vld [vmem:[%s0 + $0x188] sm:$0xff]
    %v68 = vld [vmem:[%s0 + $0x190] sm:$0xff]
    %v69 = vld [vmem:[%s0 + $0x198] sm:$0xff]
    %v70 = vld [vmem:[%s0 + $0x1a0] sm:$0xff]
    %v71 = vld [vmem:[%s0 + $0x1a8] sm:$0xff]
    %v72 = vld [vmem:[%s0 + $0x1b0] sm:$0xff]
    %v73 = vld [vmem:[%s0 + $0x1b8] sm:$0xff]
    %v74 = vld [vmem:[%s0 + $0x1c0] sm:$0xff]
    %v75 = vld [vmem:[%s0 + $0x1c8] sm:$0xff]
    %v76 = vld [vmem:[%s0 + $0x1d0] sm:$0xff]
    %v77 = vld [vmem:[%s0 + $0x1d8] sm:$0xff]
    %v78 = vld [vmem:[%s0 + $0x1e0] sm:$0xff]
    %v79 = vld [vmem:[%s0 + $0x1e8] sm:$0xff]
    %v80 = vld [vmem:[%s0 + $0x1f0] sm:$0xff]
    %v81 = vld [vmem:[%s0 + $0x1f8] sm:$0xff]
    %v82 = vld [vmem:[%s2] sm:$0xff]
    %v83 = vld [vmem:[%s2 + $0x8] sm:$0xff]
    %v84 = vld [vmem:[%s2 + $0x10] sm:$0xff]
    %v85 = vld [vmem:[%s2 + $0x18] sm:$0xff]
    %v86 = vld [vmem:[%s2 + $0x20] sm:$0xff]
    %v87 = vld [vmem:[%s2 + $0x28] sm:$0xff]
    %v88 = vld [vmem:[%s2 + $0x30] sm:$0xff]
    %v89 = vld [vmem:[%s2 + $0x38] sm:$0xff]
    %v90 = vld [vmem:[%s2 + $0x40] sm:$0xff]
    %v91 = vld [vmem:[%s2 + $0x48] sm:$0xff]
    %v92 = vld [vmem:[%s2 + $0x50] sm:$0xff]
    %v93 = vld [vmem:[%s2 + $0x58] sm:$0xff]
    %v94 = vld [vmem:[%s2 + $0x60] sm:$0xff]
    %v95 = vld [vmem:[%s2 + $0x68] sm:$0xff]
    %v96 = vld [vmem:[%s2 + $0x70] sm:$0xff]
    %v97 = vld [vmem:[%s2 + $0x78] sm:$0xff]
    %v98 = vld [vmem:[%s2 + $0x80] sm:$0xff]
    %v99 = vld [vmem:[%s2 + $0x88] sm:$0xff]
    %v100 = vld [vmem:[%s2 + $0x90] sm:$0xff]
    %v101 = vld [vmem:[%s2 + $0x98] sm:$0xff]
    %v102 = vld [vmem:[%s2 + $0xa0] sm:$0xff]
    %v103 = vld [vmem:[%s2 + $0xa8] sm:$0xff]
    %v104 = vld [vmem:[%s2 + $0xb0] sm:$0xff]
    %v105 = vld [vmem:[%s2 + $0xb8] sm:$0xff]
    %v106 = vld [vmem:[%s2 + $0xc0] sm:$0xff]
    %v107 = vld [vmem:[%s2 + $0xc8] sm:$0xff]
    %v108 = vld [vmem:[%s2 + $0xd0] sm:$0xff]
    %v109 = vld [vmem:[%s2 + $0xd8] sm:$0xff]
    %v110 = vld [vmem:[%s2 + $0xe0] sm:$0xff]
    %v111 = vld [vmem:[%s2 + $0xe8] sm:$0xff]
    %v112 = vld [vmem:[%s2 + $0xf0] sm:$0xff]
    %v113 = vld [vmem:[%s2 + $0xf8] sm:$0xff]
    %v114 = vld [vmem:[%s2 + $0x100] sm:$0xff]
    %v115 = vld [vmem:[%s2 + $0x108] sm:$0xff]
    %v116 = vld [vmem:[%s2 + $0x110] sm:$0xff]
    %v117 = vld [vmem:[%s2 + $0x118] sm:$0xff]
    %v118 = vld [vmem:[%s2 + $0x120] sm:$0xff]
    %v119 = vld [vmem:[%s2 + $0x128] sm:$0xff]
    %v120 = vld [vmem:[%s2 + $0x130] sm:$0xff]
    %v121 = vld [vmem:[%s2 + $0x138] sm:$0xff]
    %v122 = vld [vmem:[%s2 + $0x140] sm:$0xff]
    %v123 = vld [vmem:[%s2 + $0x148] sm:$0xff]
    %v124 = vld [vmem:[%s2 + $0x150] sm:$0xff]
    %v125 = vld [vmem:[%s2 + $0x158] sm:$0xff]
    %v126 = vld [vmem:[%s2 + $0x160] sm:$0xff]
    %v127 = vld [vmem:[%s2 + $0x168] sm:$0xff]
    %v128 = vld [vmem:[%s2 + $0x170] sm:$0xff]
    %v129 = vld [vmem:[%s2 + $0x178] sm:$0xff]
    %130 = vmatpush.msra.mxu0 %v127
    %131 = vmatpush.msra.mxu0 %v124
    %132 = vmatpush.msra.mxu0 %v121
    %133 = vmatpush.msra.mxu0 %v118
    %134 = vmatpush.msra.mxu0 %v115
    %135 = vmatpush.msra.mxu0 %v112
    %136 = vmatpush.msra.mxu0 %v109
    %137 = vmatpush.msra.mxu0 %v106
    %138 = vmatpush.msra.mxu0 %v103
    %139 = vmatpush.msra.mxu0 %v100
    %140 = vmatpush.msra.mxu0 %v97
    %141 = vmatpush.msra.mxu0 %v94
    %142 = vmatpush.msra.mxu0 %v91
    %143 = vmatpush.msra.mxu0 %v88
    %144 = vmatpush.msra.mxu0 %v85
    %145 = vmatpush.msra.mxu0 %v82
    %146 = vmatmul.f32.gmra.mxu0 %v18
    %v147 = vpop.f32.mrf.mxu0
    %v148 = vadd.f32 0.0, %v147
    %149 = vmatmul.f32.gmra.mxu0 %v19
    %v150 = vpop.f32.mrf.mxu0
    %v151 = vadd.f32 0.0, %v150
    %152 = vmatmul.f32.gmra.mxu0 %v20
    %v153 = vpop.f32.mrf.mxu0
    %v154 = vadd.f32 0.0, %v153
    %155 = vmatmul.f32.gmra.mxu0 %v21
    %v156 = vpop.f32.mrf.mxu0
    %v157 = vadd.f32 0.0, %v156
    %158 = vmatmul.f32.gmra.mxu0 %v22
    %v159 = vpop.f32.mrf.mxu0
    %v160 = vadd.f32 0.0, %v159
    %161 = vmatmul.f32.gmra.mxu0 %v23
    %v162 = vpop.f32.mrf.mxu0
    %v163 = vadd.f32 0.0, %v162
    %164 = vmatmul.f32.gmra.mxu0 %v24
    %v165 = vpop.f32.mrf.mxu0
    %v166 = vadd.f32 0.0, %v165
    %167 = vmatmul.f32.gmra.mxu0 %v25
    %v168 = vpop.f32.mrf.mxu0
    %v169 = vadd.f32 0.0, %v168
    %170 = vmatmul.f32.gmra.mxu0 %v26
    %v171 = vpop.f32.mrf.mxu0
    %v172 = vadd.f32 0.0, %v171
    %173 = vmatmul.f32.gmra.mxu0 %v27
    %v174 = vpop.f32.mrf.mxu0
    %v175 = vadd.f32 0.0, %v174
    %176 = vmatmul.f32.gmra.mxu0 %v28
    %v177 = vpop.f32.mrf.mxu0
    %v178 = vadd.f32 0.0, %v177
    %179 = vmatmul.f32.gmra.mxu0 %v29
    %v180 = vpop.f32.mrf.mxu0
    %v181 = vadd.f32 0.0, %v180
    %182 = vmatmul.f32.gmra.mxu0 %v30
    %v183 = vpop.f32.mrf.mxu0
    %v184 = vadd.f32 0.0, %v183
    %185 = vmatmul.f32.gmra.mxu0 %v31
    %v186 = vpop.f32.mrf.mxu0
    %v187 = vadd.f32 0.0, %v186
    %188 = vmatmul.f32.gmra.mxu0 %v32
    %v189 = vpop.f32.mrf.mxu0
    %v190 = vadd.f32 0.0, %v189
    %191 = vmatmul.f32.gmra.mxu0 %v33
    %v192 = vpop.f32.mrf.mxu0
    %v193 = vadd.f32 0.0, %v192
    %194 = vmatmul.f32.gmra.mxu0 %v34
    %v195 = vpop.f32.mrf.mxu0
    %v196 = vadd.f32 0.0, %v195
    %197 = vmatmul.f32.gmra.mxu0 %v35
    %v198 = vpop.f32.mrf.mxu0
    %v199 = vadd.f32 0.0, %v198
    %200 = vmatmul.f32.gmra.mxu0 %v36
    %v201 = vpop.f32.mrf.mxu0
    %v202 = vadd.f32 0.0, %v201
    %203 = vmatmul.f32.gmra.mxu0 %v37
    %v204 = vpop.f32.mrf.mxu0
    %v205 = vadd.f32 0.0, %v204
    %206 = vmatmul.f32.gmra.mxu0 %v38
    %v207 = vpop.f32.mrf.mxu0
    %v208 = vadd.f32 0.0, %v207
    %209 = vmatmul.f32.gmra.mxu0 %v39
    %v210 = vpop.f32.mrf.mxu0
    %v211 = vadd.f32 0.0, %v210
    %212 = vmatmul.f32.gmra.mxu0 %v40
    %v213 = vpop.f32.mrf.mxu0
    %v214 = vadd.f32 0.0, %v213
    %215 = vmatmul.f32.gmra.mxu0 %v41
    %v216 = vpop.f32.mrf.mxu0
    %v217 = vadd.f32 0.0, %v216
    %218 = vmatmul.f32.gmra.mxu0 %v42
    %v219 = vpop.f32.mrf.mxu0
    %v220 = vadd.f32 0.0, %v219
    %221 = vmatmul.f32.gmra.mxu0 %v43
    %v222 = vpop.f32.mrf.mxu0
    %v223 = vadd.f32 0.0, %v222
    %224 = vmatmul.f32.gmra.mxu0 %v44
    %v225 = vpop.f32.mrf.mxu0
    %v226 = vadd.f32 0.0, %v225
    %227 = vmatmul.f32.gmra.mxu0 %v45
    %v228 = vpop.f32.mrf.mxu0
    %v229 = vadd.f32 0.0, %v228
    %230 = vmatmul.f32.gmra.mxu0 %v46
    %v231 = vpop.f32.mrf.mxu0
    %v232 = vadd.f32 0.0, %v231
    %233 = vmatmul.f32.gmra.mxu0 %v47
    %v234 = vpop.f32.mrf.mxu0
    %v235 = vadd.f32 0.0, %v234
    %236 = vmatmul.f32.gmra.mxu0 %v48
    %v237 = vpop.f32.mrf.mxu0
    %v238 = vadd.f32 0.0, %v237
    %239 = vmatmul.f32.gmra.mxu0 %v49
    %v240 = vpop.f32.mrf.mxu0
    %v241 = vadd.f32 0.0, %v240
    %242 = vmatmul.f32.gmra.mxu0 %v50
    %v243 = vpop.f32.mrf.mxu0
    %v244 = vadd.f32 0.0, %v243
    %245 = vmatmul.f32.gmra.mxu0 %v51
    %v246 = vpop.f32.mrf.mxu0
    %v247 = vadd.f32 0.0, %v246
    %248 = vmatmul.f32.gmra.mxu0 %v52
    %v249 = vpop.f32.mrf.mxu0
    %v250 = vadd.f32 0.0, %v249
    %251 = vmatmul.f32.gmra.mxu0 %v53
    %v252 = vpop.f32.mrf.mxu0
    %v253 = vadd.f32 0.0, %v252
    %254 = vmatmul.f32.gmra.mxu0 %v54
    %v255 = vpop.f32.mrf.mxu0
    %v256 = vadd.f32 0.0, %v255
    %257 = vmatmul.f32.gmra.mxu0 %v55
    %v258 = vpop.f32.mrf.mxu0
    %v259 = vadd.f32 0.0, %v258
    %260 = vmatmul.f32.gmra.mxu0 %v56
    %v261 = vpop.f32.mrf.mxu0
    %v262 = vadd.f32 0.0, %v261
    %263 = vmatmul.f32.gmra.mxu0 %v57
    %v264 = vpop.f32.mrf.mxu0
    %v265 = vadd.f32 0.0, %v264
    %266 = vmatmul.f32.gmra.mxu0 %v58
    %v267 = vpop.f32.mrf.mxu0
    %v268 = vadd.f32 0.0, %v267
    %269 = vmatmul.f32.gmra.mxu0 %v59
    %v270 = vpop.f32.mrf.mxu0
    %v271 = vadd.f32 0.0, %v270
    %272 = vmatmul.f32.gmra.mxu0 %v60
    %v273 = vpop.f32.mrf.mxu0
    %v274 = vadd.f32 0.0, %v273
    %275 = vmatmul.f32.gmra.mxu0 %v61
    %v276 = vpop.f32.mrf.mxu0
    %v277 = vadd.f32 0.0, %v276
    %278 = vmatmul.f32.gmra.mxu0 %v62
    %v279 = vpop.f32.mrf.mxu0
    %v280 = vadd.f32 0.0, %v279
    %281 = vmatmul.f32.gmra.mxu0 %v63
    %v282 = vpop.f32.mrf.mxu0
    %v283 = vadd.f32 0.0, %v282
    %284 = vmatmul.f32.gmra.mxu0 %v64
    %v285 = vpop.f32.mrf.mxu0
    %v286 = vadd.f32 0.0, %v285
    %287 = vmatmul.f32.gmra.mxu0 %v65
    %v288 = vpop.f32.mrf.mxu0
    %v289 = vadd.f32 0.0, %v288
    %290 = vmatmul.f32.gmra.mxu0 %v66
    %v291 = vpop.f32.mrf.mxu0
    %v292 = vadd.f32 0.0, %v291
    %293 = vmatmul.f32.gmra.mxu0 %v67
    %v294 = vpop.f32.mrf.mxu0
    %v295 = vadd.f32 0.0, %v294
    %296 = vmatmul.f32.gmra.mxu0 %v68
    %v297 = vpop.f32.mrf.mxu0
    %v298 = vadd.f32 0.0, %v297
    %299 = vmatmul.f32.gmra.mxu0 %v69
    %v300 = vpop.f32.mrf.mxu0
    %v301 = vadd.f32 0.0, %v300
    %302 = vmatmul.f32.gmra.mxu0 %v70
    %v303 = vpop.f32.mrf.mxu0
    %v304 = vadd.f32 0.0, %v303
    %305 = vmatmul.f32.gmra.mxu0 %v71
    %v306 = vpop.f32.mrf.mxu0
    %v307 = vadd.f32 0.0, %v306
    %308 = vmatmul.f32.gmra.mxu0 %v72
    %v309 = vpop.f32.mrf.mxu0
    %v310 = vadd.f32 0.0, %v309
    %311 = vmatmul.f32.gmra.mxu0 %v73
    %v312 = vpop.f32.mrf.mxu0
    %v313 = vadd.f32 0.0, %v312
    %314 = vmatmul.f32.gmra.mxu0 %v74
    %v315 = vpop.f32.mrf.mxu0
    %v316 = vadd.f32 0.0, %v315
    %317 = vmatmul.f32.gmra.mxu0 %v75
    %v318 = vpop.f32.mrf.mxu0
    %v319 = vadd.f32 0.0, %v318
    %320 = vmatmul.f32.gmra.mxu0 %v76
    %v321 = vpop.f32.mrf.mxu0
    %v322 = vadd.f32 0.0, %v321
    %323 = vmatmul.f32.gmra.mxu0 %v77
    %v324 = vpop.f32.mrf.mxu0
    %v325 = vadd.f32 0.0, %v324
    %326 = vmatmul.f32.gmra.mxu0 %v78
    %v327 = vpop.f32.mrf.mxu0
    %v328 = vadd.f32 0.0, %v327
    %329 = vmatmul.f32.gmra.mxu0 %v79
    %v330 = vpop.f32.mrf.mxu0
    %v331 = vadd.f32 0.0, %v330
    %332 = vmatmul.f32.gmra.mxu0 %v80
    %v333 = vpop.f32.mrf.mxu0
    %v334 = vadd.f32 0.0, %v333
    %335 = vmatmul.f32.gmra.mxu0 %v81
    %v336 = vpop.f32.mrf.mxu0
    %v337 = vadd.f32 0.0, %v336
    %338 = vdwg.mxu0
    %339 = vmatpush.msra.mxu0 %v128
    %340 = vmatpush.msra.mxu0 %v125
    %341 = vmatpush.msra.mxu0 %v122
    %342 = vmatpush.msra.mxu0 %v119
    %343 = vmatpush.msra.mxu0 %v116
    %344 = vmatpush.msra.mxu0 %v113
    %345 = vmatpush.msra.mxu0 %v110
    %346 = vmatpush.msra.mxu0 %v107
    %347 = vmatpush.msra.mxu0 %v104
    %348 = vmatpush.msra.mxu0 %v101
    %349 = vmatpush.msra.mxu0 %v98
    %350 = vmatpush.msra.mxu0 %v95
    %351 = vmatpush.msra.mxu0 %v92
    %352 = vmatpush.msra.mxu0 %v89
    %353 = vmatpush.msra.mxu0 %v86
    %354 = vmatpush.msra.mxu0 %v83
    %355 = vmatmul.f32.gmra.mxu0 %v18
    %v356 = vpop.f32.mrf.mxu0
    %v357 = vadd.f32 0.0, %v356
    %358 = vmatmul.f32.gmra.mxu0 %v19
    %v359 = vpop.f32.mrf.mxu0
    %v360 = vadd.f32 0.0, %v359
    %361 = vmatmul.f32.gmra.mxu0 %v20
    %v362 = vpop.f32.mrf.mxu0
    %v363 = vadd.f32 0.0, %v362
    %364 = vmatmul.f32.gmra.mxu0 %v21
    %v365 = vpop.f32.mrf.mxu0
    %v366 = vadd.f32 0.0, %v365
    %367 = vmatmul.f32.gmra.mxu0 %v22
    %v368 = vpop.f32.mrf.mxu0
    %v369 = vadd.f32 0.0, %v368
    %370 = vmatmul.f32.gmra.mxu0 %v23
    %v371 = vpop.f32.mrf.mxu0
    %v372 = vadd.f32 0.0, %v371
    %373 = vmatmul.f32.gmra.mxu0 %v24
    %v374 = vpop.f32.mrf.mxu0
    %v375 = vadd.f32 0.0, %v374
    %376 = vmatmul.f32.gmra.mxu0 %v25
    %v377 = vpop.f32.mrf.mxu0
    %v378 = vadd.f32 0.0, %v377
    %379 = vmatmul.f32.gmra.mxu0 %v26
    %v380 = vpop.f32.mrf.mxu0
    %v381 = vadd.f32 0.0, %v380
    %382 = vmatmul.f32.gmra.mxu0 %v27
    %v383 = vpop.f32.mrf.mxu0
    %v384 = vadd.f32 0.0, %v383
    %385 = vmatmul.f32.gmra.mxu0 %v28
    %v386 = vpop.f32.mrf.mxu0
    %v387 = vadd.f32 0.0, %v386
    %388 = vmatmul.f32.gmra.mxu0 %v29
    %v389 = vpop.f32.mrf.mxu0
    %v390 = vadd.f32 0.0, %v389
    %391 = vmatmul.f32.gmra.mxu0 %v30
    %v392 = vpop.f32.mrf.mxu0
    %v393 = vadd.f32 0.0, %v392
    %394 = vmatmul.f32.gmra.mxu0 %v31
    %v395 = vpop.f32.mrf.mxu0
    %v396 = vadd.f32 0.0, %v395
    %397 = vmatmul.f32.gmra.mxu0 %v32
    %v398 = vpop.f32.mrf.mxu0
    %v399 = vadd.f32 0.0, %v398
    %400 = vmatmul.f32.gmra.mxu0 %v33
    %v401 = vpop.f32.mrf.mxu0
    %v402 = vadd.f32 0.0, %v401
    %403 = vmatmul.f32.gmra.mxu0 %v34
    %v404 = vpop.f32.mrf.mxu0
    %v405 = vadd.f32 0.0, %v404
    %406 = vmatmul.f32.gmra.mxu0 %v35
    %v407 = vpop.f32.mrf.mxu0
    %v408 = vadd.f32 0.0, %v407
    %409 = vmatmul.f32.gmra.mxu0 %v36
    %v410 = vpop.f32.mrf.mxu0
    %v411 = vadd.f32 0.0, %v410
    %412 = vmatmul.f32.gmra.mxu0 %v37
    %v413 = vpop.f32.mrf.mxu0
    %v414 = vadd.f32 0.0, %v413
    %415 = vmatmul.f32.gmra.mxu0 %v38
    %v416 = vpop.f32.mrf.mxu0
    %v417 = vadd.f32 0.0, %v416
    %418 = vmatmul.f32.gmra.mxu0 %v39
    %v419 = vpop.f32.mrf.mxu0
    %v420 = vadd.f32 0.0, %v419
    %421 = vmatmul.f32.gmra.mxu0 %v40
    %v422 = vpop.f32.mrf.mxu0
    %v423 = vadd.f32 0.0, %v422
    %424 = vmatmul.f32.gmra.mxu0 %v41
    %v425 = vpop.f32.mrf.mxu0
    %v426 = vadd.f32 0.0, %v425
    %427 = vmatmul.f32.gmra.mxu0 %v42
    %v428 = vpop.f32.mrf.mxu0
    %v429 = vadd.f32 0.0, %v428
    %430 = vmatmul.f32.gmra.mxu0 %v43
    %v431 = vpop.f32.mrf.mxu0
    %v432 = vadd.f32 0.0, %v431
    %433 = vmatmul.f32.gmra.mxu0 %v44
    %v434 = vpop.f32.mrf.mxu0
    %v435 = vadd.f32 0.0, %v434
    %436 = vmatmul.f32.gmra.mxu0 %v45
    %v437 = vpop.f32.mrf.mxu0
    %v438 = vadd.f32 0.0, %v437
    %439 = vmatmul.f32.gmra.mxu0 %v46
    %v440 = vpop.f32.mrf.mxu0
    %v441 = vadd.f32 0.0, %v440
    %442 = vmatmul.f32.gmra.mxu0 %v47
    %v443 = vpop.f32.mrf.mxu0
    %v444 = vadd.f32 0.0, %v443
    %445 = vmatmul.f32.gmra.mxu0 %v48
    %v446 = vpop.f32.mrf.mxu0
    %v447 = vadd.f32 0.0, %v446
    %448 = vmatmul.f32.gmra.mxu0 %v49
    %v449 = vpop.f32.mrf.mxu0
    %v450 = vadd.f32 0.0, %v449
    %451 = vmatmul.f32.gmra.mxu0 %v50
    %v452 = vpop.f32.mrf.mxu0
    %v453 = vadd.f32 0.0, %v452
    %454 = vmatmul.f32.gmra.mxu0 %v51
    %v455 = vpop.f32.mrf.mxu0
    %v456 = vadd.f32 0.0, %v455
    %457 = vmatmul.f32.gmra.mxu0 %v52
    %v458 = vpop.f32.mrf.mxu0
    %v459 = vadd.f32 0.0, %v458
    %460 = vmatmul.f32.gmra.mxu0 %v53
    %v461 = vpop.f32.mrf.mxu0
    %v462 = vadd.f32 0.0, %v461
    %463 = vmatmul.f32.gmra.mxu0 %v54
    %v464 = vpop.f32.mrf.mxu0
    %v465 = vadd.f32 0.0, %v464
    %466 = vmatmul.f32.gmra.mxu0 %v55
    %v467 = vpop.f32.mrf.mxu0
    %v468 = vadd.f32 0.0, %v467
    %469 = vmatmul.f32.gmra.mxu0 %v56
    %v470 = vpop.f32.mrf.mxu0
    %v471 = vadd.f32 0.0, %v470
    %472 = vmatmul.f32.gmra.mxu0 %v57
    %v473 = vpop.f32.mrf.mxu0
    %v474 = vadd.f32 0.0, %v473
    %475 = vmatmul.f32.gmra.mxu0 %v58
    %v476 = vpop.f32.mrf.mxu0
    %v477 = vadd.f32 0.0, %v476
    %478 = vmatmul.f32.gmra.mxu0 %v59
    %v479 = vpop.f32.mrf.mxu0
    %v480 = vadd.f32 0.0, %v479
    %481 = vmatmul.f32.gmra.mxu0 %v60
    %v482 = vpop.f32.mrf.mxu0
    %v483 = vadd.f32 0.0, %v482
    %484 = vmatmul.f32.gmra.mxu0 %v61
    %v485 = vpop.f32.mrf.mxu0
    %v486 = vadd.f32 0.0, %v485
    %487 = vmatmul.f32.gmra.mxu0 %v62
    %v488 = vpop.f32.mrf.mxu0
    %v489 = vadd.f32 0.0, %v488
    %490 = vmatmul.f32.gmra.mxu0 %v63
    %v491 = vpop.f32.mrf.mxu0
    %v492 = vadd.f32 0.0, %v491
    %493 = vmatmul.f32.gmra.mxu0 %v64
    %v494 = vpop.f32.mrf.mxu0
    %v495 = vadd.f32 0.0, %v494
    %496 = vmatmul.f32.gmra.mxu0 %v65
    %v497 = vpop.f32.mrf.mxu0
    %v498 = vadd.f32 0.0, %v497
    %499 = vmatmul.f32.gmra.mxu0 %v66
    %v500 = vpop.f32.mrf.mxu0
    %v501 = vadd.f32 0.0, %v500
    %502 = vmatmul.f32.gmra.mxu0 %v67
    %v503 = vpop.f32.mrf.mxu0
    %v504 = vadd.f32 0.0, %v503
    %505 = vmatmul.f32.gmra.mxu0 %v68
    %v506 = vpop.f32.mrf.mxu0
    %v507 = vadd.f32 0.0, %v506
    %508 = vmatmul.f32.gmra.mxu0 %v69
    %v509 = vpop.f32.mrf.mxu0
    %v510 = vadd.f32 0.0, %v509
    %511 = vmatmul.f32.gmra.mxu0 %v70
    %v512 = vpop.f32.mrf.mxu0
    %v513 = vadd.f32 0.0, %v512
    %514 = vmatmul.f32.gmra.mxu0 %v71
    %v515 = vpop.f32.mrf.mxu0
    %v516 = vadd.f32 0.0, %v515
    %517 = vmatmul.f32.gmra.mxu0 %v72
    %v518 = vpop.f32.mrf.mxu0
    %v519 = vadd.f32 0.0, %v518
    %520 = vmatmul.f32.gmra.mxu0 %v73
    %v521 = vpop.f32.mrf.mxu0
    %v522 = vadd.f32 0.0, %v521
    %523 = vmatmul.f32.gmra.mxu0 %v74
    %v524 = vpop.f32.mrf.mxu0
    %v525 = vadd.f32 0.0, %v524
    %526 = vmatmul.f32.gmra.mxu0 %v75
    %v527 = vpop.f32.mrf.mxu0
    %v528 = vadd.f32 0.0, %v527
    %529 = vmatmul.f32.gmra.mxu0 %v76
    %v530 = vpop.f32.mrf.mxu0
    %v531 = vadd.f32 0.0, %v530
    %532 = vmatmul.f32.gmra.mxu0 %v77
    %v533 = vpop.f32.mrf.mxu0
    %v534 = vadd.f32 0.0, %v533
    %535 = vmatmul.f32.gmra.mxu0 %v78
    %v536 = vpop.f32.mrf.mxu0
    %v537 = vadd.f32 0.0, %v536
    %538 = vmatmul.f32.gmra.mxu0 %v79
    %v539 = vpop.f32.mrf.mxu0
    %v540 = vadd.f32 0.0, %v539
    %541 = vmatmul.f32.gmra.mxu0 %v80
    %v542 = vpop.f32.mrf.mxu0
    %v543 = vadd.f32 0.0, %v542
    %544 = vmatmul.f32.gmra.mxu0 %v81
    %v545 = vpop.f32.mrf.mxu0
    %v546 = vadd.f32 0.0, %v545
    %547 = vdwg.mxu0
    %548 = vmatpush.msra.mxu0 %v129
    %549 = vmatpush.msra.mxu0 %v126
    %550 = vmatpush.msra.mxu0 %v123
    %551 = vmatpush.msra.mxu0 %v120
    %552 = vmatpush.msra.mxu0 %v117
    %553 = vmatpush.msra.mxu0 %v114
    %554 = vmatpush.msra.mxu0 %v111
    %555 = vmatpush.msra.mxu0 %v108
    %556 = vmatpush.msra.mxu0 %v105
    %557 = vmatpush.msra.mxu0 %v102
    %558 = vmatpush.msra.mxu0 %v99
    %559 = vmatpush.msra.mxu0 %v96
    %560 = vmatpush.msra.mxu0 %v93
    %561 = vmatpush.msra.mxu0 %v90
    %562 = vmatpush.msra.mxu0 %v87
    %563 = vmatpush.msra.mxu0 %v84
    %564 = vmatmul.f32.gmra.mxu0 %v18
    %v565 = vpop.f32.mrf.mxu0
    %v566 = vadd.f32 0.0, %v565
    %567 = vmatmul.f32.gmra.mxu0 %v19
    %v568 = vpop.f32.mrf.mxu0
    %v569 = vadd.f32 0.0, %v568
    %570 = vmatmul.f32.gmra.mxu0 %v20
    %v571 = vpop.f32.mrf.mxu0
    %v572 = vadd.f32 0.0, %v571
    %573 = vmatmul.f32.gmra.mxu0 %v21
    %v574 = vpop.f32.mrf.mxu0
    %v575 = vadd.f32 0.0, %v574
    %576 = vmatmul.f32.gmra.mxu0 %v22
    %v577 = vpop.f32.mrf.mxu0
    %v578 = vadd.f32 0.0, %v577
    %579 = vmatmul.f32.gmra.mxu0 %v23
    %v580 = vpop.f32.mrf.mxu0
    %v581 = vadd.f32 0.0, %v580
    %582 = vmatmul.f32.gmra.mxu0 %v24
    %v583 = vpop.f32.mrf.mxu0
    %v584 = vadd.f32 0.0, %v583
    %585 = vmatmul.f32.gmra.mxu0 %v25
    %v586 = vpop.f32.mrf.mxu0
    %v587 = vadd.f32 0.0, %v586
    %588 = vmatmul.f32.gmra.mxu0 %v26
    %v589 = vpop.f32.mrf.mxu0
    %v590 = vadd.f32 0.0, %v589
    %591 = vmatmul.f32.gmra.mxu0 %v27
    %v592 = vpop.f32.mrf.mxu0
    %v593 = vadd.f32 0.0, %v592
    %594 = vmatmul.f32.gmra.mxu0 %v28
    %v595 = vpop.f32.mrf.mxu0
    %v596 = vadd.f32 0.0, %v595
    %597 = vmatmul.f32.gmra.mxu0 %v29
    %v598 = vpop.f32.mrf.mxu0
    %v599 = vadd.f32 0.0, %v598
    %600 = vmatmul.f32.gmra.mxu0 %v30
    %v601 = vpop.f32.mrf.mxu0
    %v602 = vadd.f32 0.0, %v601
    %603 = vmatmul.f32.gmra.mxu0 %v31
    %v604 = vpop.f32.mrf.mxu0
    %v605 = vadd.f32 0.0, %v604
    %606 = vmatmul.f32.gmra.mxu0 %v32
    %v607 = vpop.f32.mrf.mxu0
    %v608 = vadd.f32 0.0, %v607
    %609 = vmatmul.f32.gmra.mxu0 %v33
    %v610 = vpop.f32.mrf.mxu0
    %v611 = vadd.f32 0.0, %v610
    %612 = vmatmul.f32.gmra.mxu0 %v34
    %v613 = vpop.f32.mrf.mxu0
    %v614 = vadd.f32 0.0, %v613
    %615 = vmatmul.f32.gmra.mxu0 %v35
    %v616 = vpop.f32.mrf.mxu0
    %v617 = vadd.f32 0.0, %v616
    %618 = vmatmul.f32.gmra.mxu0 %v36
    %v619 = vpop.f32.mrf.mxu0
    %v620 = vadd.f32 0.0, %v619
    %621 = vmatmul.f32.gmra.mxu0 %v37
    %v622 = vpop.f32.mrf.mxu0
    %v623 = vadd.f32 0.0, %v622
    %624 = vmatmul.f32.gmra.mxu0 %v38
    %v625 = vpop.f32.mrf.mxu0
    %v626 = vadd.f32 0.0, %v625
    %627 = vmatmul.f32.gmra.mxu0 %v39
    %v628 = vpop.f32.mrf.mxu0
    %v629 = vadd.f32 0.0, %v628
    %630 = vmatmul.f32.gmra.mxu0 %v40
    %v631 = vpop.f32.mrf.mxu0
    %v632 = vadd.f32 0.0, %v631
    %633 = vmatmul.f32.gmra.mxu0 %v41
    %v634 = vpop.f32.mrf.mxu0
    %v635 = vadd.f32 0.0, %v634
    %636 = vmatmul.f32.gmra.mxu0 %v42
    %v637 = vpop.f32.mrf.mxu0
    %v638 = vadd.f32 0.0, %v637
    %639 = vmatmul.f32.gmra.mxu0 %v43
    %v640 = vpop.f32.mrf.mxu0
    %v641 = vadd.f32 0.0, %v640
    %642 = vmatmul.f32.gmra.mxu0 %v44
    %v643 = vpop.f32.mrf.mxu0
    %v644 = vadd.f32 0.0, %v643
    %645 = vmatmul.f32.gmra.mxu0 %v45
    %v646 = vpop.f32.mrf.mxu0
    %v647 = vadd.f32 0.0, %v646
    %648 = vmatmul.f32.gmra.mxu0 %v46
    %v649 = vpop.f32.mrf.mxu0
    %v650 = vadd.f32 0.0, %v649
    %651 = vmatmul.f32.gmra.mxu0 %v47
    %v652 = vpop.f32.mrf.mxu0
    %v653 = vadd.f32 0.0, %v652
    %654 = vmatmul.f32.gmra.mxu0 %v48
    %v655 = vpop.f32.mrf.mxu0
    %v656 = vadd.f32 0.0, %v655
    %657 = vmatmul.f32.gmra.mxu0 %v49
    %v658 = vpop.f32.mrf.mxu0
    %v659 = vadd.f32 0.0, %v658
    %660 = vmatmul.f32.gmra.mxu0 %v50
    %v661 = vpop.f32.mrf.mxu0
    %v662 = vadd.f32 0.0, %v661
    %663 = vmatmul.f32.gmra.mxu0 %v51
    %v664 = vpop.f32.mrf.mxu0
    %v665 = vadd.f32 0.0, %v664
    %666 = vmatmul.f32.gmra.mxu0 %v52
    %v667 = vpop.f32.mrf.mxu0
    %v668 = vadd.f32 0.0, %v667
    %669 = vmatmul.f32.gmra.mxu0 %v53
    %v670 = vpop.f32.mrf.mxu0
    %v671 = vadd.f32 0.0, %v670
    %672 = vmatmul.f32.gmra.mxu0 %v54
    %v673 = vpop.f32.mrf.mxu0
    %v674 = vadd.f32 0.0, %v673
    %675 = vmatmul.f32.gmra.mxu0 %v55
    %v676 = vpop.f32.mrf.mxu0
    %v677 = vadd.f32 0.0, %v676
    %678 = vmatmul.f32.gmra.mxu0 %v56
    %v679 = vpop.f32.mrf.mxu0
    %v680 = vadd.f32 0.0, %v679
    %681 = vmatmul.f32.gmra.mxu0 %v57
    %v682 = vpop.f32.mrf.mxu0
    %v683 = vadd.f32 0.0, %v682
    %684 = vmatmul.f32.gmra.mxu0 %v58
    %v685 = vpop.f32.mrf.mxu0
    %v686 = vadd.f32 0.0, %v685
    %687 = vmatmul.f32.gmra.mxu0 %v59
    %v688 = vpop.f32.mrf.mxu0
    %v689 = vadd.f32 0.0, %v688
    %690 = vmatmul.f32.gmra.mxu0 %v60
    %v691 = vpop.f32.mrf.mxu0
    %v692 = vadd.f32 0.0, %v691
    %693 = vmatmul.f32.gmra.mxu0 %v61
    %v694 = vpop.f32.mrf.mxu0
    %v695 = vadd.f32 0.0, %v694
    %696 = vmatmul.f32.gmra.mxu0 %v62
    %v697 = vpop.f32.mrf.mxu0
    %v698 = vadd.f32 0.0, %v697
    %699 = vmatmul.f32.gmra.mxu0 %v63
    %v700 = vpop.f32.mrf.mxu0
    %v701 = vadd.f32 0.0, %v700
    %702 = vmatmul.f32.gmra.mxu0 %v64
    %v703 = vpop.f32.mrf.mxu0
    %v704 = vadd.f32 0.0, %v703
    %705 = vmatmul.f32.gmra.mxu0 %v65
    %v706 = vpop.f32.mrf.mxu0
    %v707 = vadd.f32 0.0, %v706
    %708 = vmatmul.f32.gmra.mxu0 %v66
    %v709 = vpop.f32.mrf.mxu0
    %v710 = vadd.f32 0.0, %v709
    %711 = vmatmul.f32.gmra.mxu0 %v67
    %v712 = vpop.f32.mrf.mxu0
    %v713 = vadd.f32 0.0, %v712
    %714 = vmatmul.f32.gmra.mxu0 %v68
    %v715 = vpop.f32.mrf.mxu0
    %v716 = vadd.f32 0.0, %v715
    %717 = vmatmul.f32.gmra.mxu0 %v69
    %v718 = vpop.f32.mrf.mxu0
    %v719 = vadd.f32 0.0, %v718
    %720 = vmatmul.f32.gmra.mxu0 %v70
    %v721 = vpop.f32.mrf.mxu0
    %v722 = vadd.f32 0.0, %v721
    %723 = vmatmul.f32.gmra.mxu0 %v71
    %v724 = vpop.f32.mrf.mxu0
    %v725 = vadd.f32 0.0, %v724
    %726 = vmatmul.f32.gmra.mxu0 %v72
    %v727 = vpop.f32.mrf.mxu0
    %v728 = vadd.f32 0.0, %v727
    %729 = vmatmul.f32.gmra.mxu0 %v73
    %v730 = vpop.f32.mrf.mxu0
    %v731 = vadd.f32 0.0, %v730
    %732 = vmatmul.f32.gmra.mxu0 %v74
    %v733 = vpop.f32.mrf.mxu0
    %v734 = vadd.f32 0.0, %v733
    %735 = vmatmul.f32.gmra.mxu0 %v75
    %v736 = vpop.f32.mrf.mxu0
    %v737 = vadd.f32 0.0, %v736
    %738 = vmatmul.f32.gmra.mxu0 %v76
    %v739 = vpop.f32.mrf.mxu0
    %v740 = vadd.f32 0.0, %v739
    %741 = vmatmul.f32.gmra.mxu0 %v77
    %v742 = vpop.f32.mrf.mxu0
    %v743 = vadd.f32 0.0, %v742
    %744 = vmatmul.f32.gmra.mxu0 %v78
    %v745 = vpop.f32.mrf.mxu0
    %v746 = vadd.f32 0.0, %v745
    %747 = vmatmul.f32.gmra.mxu0 %v79
    %v748 = vpop.f32.mrf.mxu0
    %v749 = vadd.f32 0.0, %v748
    %750 = vmatmul.f32.gmra.mxu0 %v80
    %v751 = vpop.f32.mrf.mxu0
    %v752 = vadd.f32 0.0, %v751
    %753 = vmatmul.f32.gmra.mxu0 %v81
    %v754 = vpop.f32.mrf.mxu0
    %v755 = vadd.f32 0.0, %v754
    %756 = vdwg.mxu0
    %757 = vst [vmem:[#allocation2] sm:$0xff] %v148
    %758 = vst [vmem:[#allocation2 + $0x8] sm:$0xff] %v357
    %759 = vst [vmem:[#allocation2 + $0x10] sm:$0xff] %v566
    %760 = vst [vmem:[#allocation2 + $0x18] sm:$0xff] %v151
    %761 = vst [vmem:[#allocation2 + $0x20] sm:$0xff] %v360
    %762 = vst [vmem:[#allocation2 + $0x28] sm:$0xff] %v569
    %763 = vst [vmem:[#allocation2 + $0x30] sm:$0xff] %v154
    %764 = vst [vmem:[#allocation2 + $0x38] sm:$0xff] %v363
    %765 = vst [vmem:[#allocation2 + $0x40] sm:$0xff] %v572
    %766 = vst [vmem:[#allocation2 + $0x48] sm:$0xff] %v157
    %767 = vst [vmem:[#allocation2 + $0x50] sm:$0xff] %v366
    %768 = vst [vmem:[#allocation2 + $0x58] sm:$0xff] %v575
    %769 = vst [vmem:[#allocation2 + $0x60] sm:$0xff] %v160
    %770 = vst [vmem:[#allocation2 + $0x68] sm:$0xff] %v369
    %771 = vst [vmem:[#allocation2 + $0x70] sm:$0xff] %v578
    %772 = vst [vmem:[#allocation2 + $0x78] sm:$0xff] %v163
    %773 = vst [vmem:[#allocation2 + $0x80] sm:$0xff] %v372
    %774 = vst [vmem:[#allocation2 + $0x88] sm:$0xff] %v581
    %775 = vst [vmem:[#allocation2 + $0x90] sm:$0xff] %v166
    %776 = vst [vmem:[#allocation2 + $0x98] sm:$0xff] %v375
    %777 = vst [vmem:[#allocation2 + $0xa0] sm:$0xff] %v584
    %778 = vst [vmem:[#allocation2 + $0xa8] sm:$0xff] %v169
    %779 = vst [vmem:[#allocation2 + $0xb0] sm:$0xff] %v378
    %780 = vst [vmem:[#allocation2 + $0xb8] sm:$0xff] %v587
    %781 = vst [vmem:[#allocation2 + $0xc0] sm:$0xff] %v172
    %782 = vst [vmem:[#allocation2 + $0xc8] sm:$0xff] %v381
    %783 = vst [vmem:[#allocation2 + $0xd0] sm:$0xff] %v590
    %784 = vst [vmem:[#allocation2 + $0xd8] sm:$0xff] %v175
    %785 = vst [vmem:[#allocation2 + $0xe0] sm:$0xff] %v384
    %786 = vst [vmem:[#allocation2 + $0xe8] sm:$0xff] %v593
    %787 = vst [vmem:[#allocation2 + $0xf0] sm:$0xff] %v178
    %788 = vst [vmem:[#allocation2 + $0xf8] sm:$0xff] %v387
    %789 = vst [vmem:[#allocation2 + $0x100] sm:$0xff] %v596
    %790 = vst [vmem:[#allocation2 + $0x108] sm:$0xff] %v181
    %791 = vst [vmem:[#allocation2 + $0x110] sm:$0xff] %v390
    %792 = vst [vmem:[#allocation2 + $0x118] sm:$0xff] %v599
    %793 = vst [vmem:[#allocation2 + $0x120] sm:$0xff] %v184
    %794 = vst [vmem:[#allocation2 + $0x128] sm:$0xff] %v393
    %795 = vst [vmem:[#allocation2 + $0x130] sm:$0xff] %v602
    %796 = vst [vmem:[#allocation2 + $0x138] sm:$0xff] %v187
    %797 = vst [vmem:[#allocation2 + $0x140] sm:$0xff] %v396
    %798 = vst [vmem:[#allocation2 + $0x148] sm:$0xff] %v605
    %799 = vst [vmem:[#allocation2 + $0x150] sm:$0xff] %v190
    %800 = vst [vmem:[#allocation2 + $0x158] sm:$0xff] %v399
    %801 = vst [vmem:[#allocation2 + $0x160] sm:$0xff] %v608
    %802 = vst [vmem:[#allocation2 + $0x168] sm:$0xff] %v193
    %803 = vst [vmem:[#allocation2 + $0x170] sm:$0xff] %v402
    %804 = vst [vmem:[#allocation2 + $0x178] sm:$0xff] %v611
    %805 = vst [vmem:[#allocation2 + $0x180] sm:$0xff] %v196
    %806 = vst [vmem:[#allocation2 + $0x188] sm:$0xff] %v405
    %807 = vst [vmem:[#allocation2 + $0x190] sm:$0xff] %v614
    %808 = vst [vmem:[#allocation2 + $0x198] sm:$0xff] %v199
    %809 = vst [vmem:[#allocation2 + $0x1a0] sm:$0xff] %v408
    %810 = vst [vmem:[#allocation2 + $0x1a8] sm:$0xff] %v617
    %811 = vst [vmem:[#allocation2 + $0x1b0] sm:$0xff] %v202
    %812 = vst [vmem:[#allocation2 + $0x1b8] sm:$0xff] %v411
    %813 = vst [vmem:[#allocation2 + $0x1c0] sm:$0xff] %v620
    %814 = vst [vmem:[#allocation2 + $0x1c8] sm:$0xff] %v205
    %815 = vst [vmem:[#allocation2 + $0x1d0] sm:$0xff] %v414
    %816 = vst [vmem:[#allocation2 + $0x1d8] sm:$0xff] %v623
    %817 = vst [vmem:[#allocation2 + $0x1e0] sm:$0xff] %v208
    %818 = vst [vmem:[#allocation2 + $0x1e8] sm:$0xff] %v417
    %819 = vst [vmem:[#allocation2 + $0x1f0] sm:$0xff] %v626
    %820 = vst [vmem:[#allocation2 + $0x1f8] sm:$0xff] %v211
    %821 = vst [vmem:[#allocation2 + $0x200] sm:$0xff] %v420
    %822 = vst [vmem:[#allocation2 + $0x208] sm:$0xff] %v629
    %823 = vst [vmem:[#allocation2 + $0x210] sm:$0xff] %v214
    %824 = vst [vmem:[#allocation2 + $0x218] sm:$0xff] %v423
    %825 = vst [vmem:[#allocation2 + $0x220] sm:$0xff] %v632
    %826 = vst [vmem:[#allocation2 + $0x228] sm:$0xff] %v217
    %827 = vst [vmem:[#allocation2 + $0x230] sm:$0xff] %v426
    %828 = vst [vmem:[#allocation2 + $0x238] sm:$0xff] %v635
    %829 = vst [vmem:[#allocation2 + $0x240] sm:$0xff] %v220
    %830 = vst [vmem:[#allocation2 + $0x248] sm:$0xff] %v429
    %831 = vst [vmem:[#allocation2 + $0x250] sm:$0xff] %v638
    %832 = vst [vmem:[#allocation2 + $0x258] sm:$0xff] %v223
    %833 = vst [vmem:[#allocation2 + $0x260] sm:$0xff] %v432
    %834 = vst [vmem:[#allocation2 + $0x268] sm:$0xff] %v641
    %835 = vst [vmem:[#allocation2 + $0x270] sm:$0xff] %v226
    %836 = vst [vmem:[#allocation2 + $0x278] sm:$0xff] %v435
    %837 = vst [vmem:[#allocation2 + $0x280] sm:$0xff] %v644
    %838 = vst [vmem:[#allocation2 + $0x288] sm:$0xff] %v229
    %839 = vst [vmem:[#allocation2 + $0x290] sm:$0xff] %v438
    %840 = vst [vmem:[#allocation2 + $0x298] sm:$0xff] %v647
    %841 = vst [vmem:[#allocation2 + $0x2a0] sm:$0xff] %v232
    %842 = vst [vmem:[#allocation2 + $0x2a8] sm:$0xff] %v441
    %843 = vst [vmem:[#allocation2 + $0x2b0] sm:$0xff] %v650
    %844 = vst [vmem:[#allocation2 + $0x2b8] sm:$0xff] %v235
    %845 = vst [vmem:[#allocation2 + $0x2c0] sm:$0xff] %v444
    %846 = vst [vmem:[#allocation2 + $0x2c8] sm:$0xff] %v653
    %847 = vst [vmem:[#allocation2 + $0x2d0] sm:$0xff] %v238
    %848 = vst [vmem:[#allocation2 + $0x2d8] sm:$0xff] %v447
    %849 = vst [vmem:[#allocation2 + $0x2e0] sm:$0xff] %v656
    %850 = vst [vmem:[#allocation2 + $0x2e8] sm:$0xff] %v241
    %851 = vst [vmem:[#allocation2 + $0x2f0] sm:$0xff] %v450
    %852 = vst [vmem:[#allocation2 + $0x2f8] sm:$0xff] %v659
    %853 = vst [vmem:[#allocation2 + $0x300] sm:$0xff] %v244
    %854 = vst [vmem:[#allocation2 + $0x308] sm:$0xff] %v453
    %855 = vst [vmem:[#allocation2 + $0x310] sm:$0xff] %v662
    %856 = vst [vmem:[#allocation2 + $0x318] sm:$0xff] %v247
    %857 = vst [vmem:[#allocation2 + $0x320] sm:$0xff] %v456
    %858 = vst [vmem:[#allocation2 + $0x328] sm:$0xff] %v665
    %859 = vst [vmem:[#allocation2 + $0x330] sm:$0xff] %v250
    %860 = vst [vmem:[#allocation2 + $0x338] sm:$0xff] %v459
    %861 = vst [vmem:[#allocation2 + $0x340] sm:$0xff] %v668
    %862 = vst [vmem:[#allocation2 + $0x348] sm:$0xff] %v253
    %863 = vst [vmem:[#allocation2 + $0x350] sm:$0xff] %v462
    %864 = vst [vmem:[#allocation2 + $0x358] sm:$0xff] %v671
    %865 = vst [vmem:[#allocation2 + $0x360] sm:$0xff] %v256
    %866 = vst [vmem:[#allocation2 + $0x368] sm:$0xff] %v465
    %867 = vst [vmem:[#allocation2 + $0x370] sm:$0xff] %v674
    %868 = vst [vmem:[#allocation2 + $0x378] sm:$0xff] %v259
    %869 = vst [vmem:[#allocation2 + $0x380] sm:$0xff] %v468
    %870 = vst [vmem:[#allocation2 + $0x388] sm:$0xff] %v677
    %871 = vst [vmem:[#allocation2 + $0x390] sm:$0xff] %v262
    %872 = vst [vmem:[#allocation2 + $0x398] sm:$0xff] %v471
    %873 = vst [vmem:[#allocation2 + $0x3a0] sm:$0xff] %v680
    %874 = vst [vmem:[#allocation2 + $0x3a8] sm:$0xff] %v265
    %875 = vst [vmem:[#allocation2 + $0x3b0] sm:$0xff] %v474
    %876 = vst [vmem:[#allocation2 + $0x3b8] sm:$0xff] %v683
    %877 = vst [vmem:[#allocation2 + $0x3c0] sm:$0xff] %v268
    %878 = vst [vmem:[#allocation2 + $0x3c8] sm:$0xff] %v477
    %879 = vst [vmem:[#allocation2 + $0x3d0] sm:$0xff] %v686
    %880 = vst [vmem:[#allocation2 + $0x3d8] sm:$0xff] %v271
    %881 = vst [vmem:[#allocation2 + $0x3e0] sm:$0xff] %v480
    %882 = vst [vmem:[#allocation2 + $0x3e8] sm:$0xff] %v689
    %883 = vst [vmem:[#allocation2 + $0x3f0] sm:$0xff] %v274
    %884 = vst [vmem:[#allocation2 + $0x3f8] sm:$0xff] %v483
    %885 = vst [vmem:[#allocation2 + $0x400] sm:$0xff] %v692
    %886 = vst [vmem:[#allocation2 + $0x408] sm:$0xff] %v277
    %887 = vst [vmem:[#allocation2 + $0x410] sm:$0xff] %v486
    %888 = vst [vmem:[#allocation2 + $0x418] sm:$0xff] %v695
    %889 = vst [vmem:[#allocation2 + $0x420] sm:$0xff] %v280
    %890 = vst [vmem:[#allocation2 + $0x428] sm:$0xff] %v489
    %891 = vst [vmem:[#allocation2 + $0x430] sm:$0xff] %v698
    %892 = vst [vmem:[#allocation2 + $0x438] sm:$0xff] %v283
    %893 = vst [vmem:[#allocation2 + $0x440] sm:$0xff] %v492
    %894 = vst [vmem:[#allocation2 + $0x448] sm:$0xff] %v701
    %895 = vst [vmem:[#allocation2 + $0x450] sm:$0xff] %v286
    %896 = vst [vmem:[#allocation2 + $0x458] sm:$0xff] %v495
    %897 = vst [vmem:[#allocation2 + $0x460] sm:$0xff] %v704
    %898 = vst [vmem:[#allocation2 + $0x468] sm:$0xff] %v289
    %899 = vst [vmem:[#allocation2 + $0x470] sm:$0xff] %v498
    %900 = vst [vmem:[#allocation2 + $0x478] sm:$0xff] %v707
    %901 = vst [vmem:[#allocation2 + $0x480] sm:$0xff] %v292
    %902 = vst [vmem:[#allocation2 + $0x488] sm:$0xff] %v501
    %903 = vst [vmem:[#allocation2 + $0x490] sm:$0xff] %v710
    %904 = vst [vmem:[#allocation2 + $0x498] sm:$0xff] %v295
    %905 = vst [vmem:[#allocation2 + $0x4a0] sm:$0xff] %v504
    %906 = vst [vmem:[#allocation2 + $0x4a8] sm:$0xff] %v713
    %907 = vst [vmem:[#allocation2 + $0x4b0] sm:$0xff] %v298
    %908 = vst [vmem:[#allocation2 + $0x4b8] sm:$0xff] %v507
    %909 = vst [vmem:[#allocation2 + $0x4c0] sm:$0xff] %v716
    %910 = vst [vmem:[#allocation2 + $0x4c8] sm:$0xff] %v301
    %911 = vst [vmem:[#allocation2 + $0x4d0] sm:$0xff] %v510
    %912 = vst [vmem:[#allocation2 + $0x4d8] sm:$0xff] %v719
    %913 = vst [vmem:[#allocation2 + $0x4e0] sm:$0xff] %v304
    %914 = vst [vmem:[#allocation2 + $0x4e8] sm:$0xff] %v513
    %915 = vst [vmem:[#allocation2 + $0x4f0] sm:$0xff] %v722
    %916 = vst [vmem:[#allocation2 + $0x4f8] sm:$0xff] %v307
    %917 = vst [vmem:[#allocation2 + $0x500] sm:$0xff] %v516
    %918 = vst [vmem:[#allocation2 + $0x508] sm:$0xff] %v725
    %919 = vst [vmem:[#allocation2 + $0x510] sm:$0xff] %v310
    %920 = vst [vmem:[#allocation2 + $0x518] sm:$0xff] %v519
    %921 = vst [vmem:[#allocation2 + $0x520] sm:$0xff] %v728
    %922 = vst [vmem:[#allocation2 + $0x528] sm:$0xff] %v313
    %923 = vst [vmem:[#allocation2 + $0x530] sm:$0xff] %v522
    %924 = vst [vmem:[#allocation2 + $0x538] sm:$0xff] %v731
    %925 = vst [vmem:[#allocation2 + $0x540] sm:$0xff] %v316
    %926 = vst [vmem:[#allocation2 + $0x548] sm:$0xff] %v525
    %927 = vst [vmem:[#allocation2 + $0x550] sm:$0xff] %v734
    %928 = vst [vmem:[#allocation2 + $0x558] sm:$0xff] %v319
    %929 = vst [vmem:[#allocation2 + $0x560] sm:$0xff] %v528
    %930 = vst [vmem:[#allocation2 + $0x568] sm:$0xff] %v737
    %931 = vst [vmem:[#allocation2 + $0x570] sm:$0xff] %v322
    %932 = vst [vmem:[#allocation2 + $0x578] sm:$0xff] %v531
    %933 = vst [vmem:[#allocation2 + $0x580] sm:$0xff] %v740
    %934 = vst [vmem:[#allocation2 + $0x588] sm:$0xff] %v325
    %935 = vst [vmem:[#allocation2 + $0x590] sm:$0xff] %v534
    %936 = vst [vmem:[#allocation2 + $0x598] sm:$0xff] %v743
    %937 = vst [vmem:[#allocation2 + $0x5a0] sm:$0xff] %v328
    %938 = vst [vmem:[#allocation2 + $0x5a8] sm:$0xff] %v537
    %939 = vst [vmem:[#allocation2 + $0x5b0] sm:$0xff] %v746
    %940 = vst [vmem:[#allocation2 + $0x5b8] sm:$0xff] %v331
    %941 = vst [vmem:[#allocation2 + $0x5c0] sm:$0xff] %v540
    %942 = vst [vmem:[#allocation2 + $0x5c8] sm:$0xff] %v749
    %943 = vst [vmem:[#allocation2 + $0x5d0] sm:$0xff] %v334
    %944 = vst [vmem:[#allocation2 + $0x5d8] sm:$0xff] %v543
    %945 = vst [vmem:[#allocation2 + $0x5e0] sm:$0xff] %v752
    %946 = vst [vmem:[#allocation2 + $0x5e8] sm:$0xff] %v337
    %947 = vst [vmem:[#allocation2 + $0x5f0] sm:$0xff] %v546
    %948 = vst [vmem:[#allocation2 + $0x5f8] sm:$0xff] %v755
    %v949 = vld [vmem:[%s3] sm:$0x1]
    %v950 = vld [vmem:[#allocation2] sm:$0xff]
    %v951 = vld [vmem:[#allocation2 + $0x18] sm:$0xff]
    %v952 = vld [vmem:[#allocation2 + $0x30] sm:$0xff]
    %v953 = vld [vmem:[#allocation2 + $0x48] sm:$0xff]
    %v954 = vld [vmem:[#allocation2 + $0x60] sm:$0xff]
    %v955 = vld [vmem:[#allocation2 + $0x78] sm:$0xff]
    %v956 = vld [vmem:[#allocation2 + $0x90] sm:$0xff]
    %v957 = vld [vmem:[#allocation2 + $0xa8] sm:$0xff]
    %v958 = vld [vmem:[#allocation2 + $0xc0] sm:$0xff]
    %v959 = vld [vmem:[#allocation2 + $0xd8] sm:$0xff]
    %v960 = vld [vmem:[#allocation2 + $0xf0] sm:$0xff]
    %v961 = vld [vmem:[#allocation2 + $0x108] sm:$0xff]
    %v962 = vld [vmem:[#allocation2 + $0x120] sm:$0xff]
    %v963 = vld [vmem:[#allocation2 + $0x138] sm:$0xff]
    %v964 = vld [vmem:[#allocation2 + $0x150] sm:$0xff]
    %v965 = vld [vmem:[#allocation2 + $0x168] sm:$0xff]
    %v966 = vld [vmem:[#allocation2 + $0x180] sm:$0xff]
    %v967 = vld [vmem:[#allocation2 + $0x198] sm:$0xff]
    %v968 = vld [vmem:[#allocation2 + $0x1b0] sm:$0xff]
    %v969 = vld [vmem:[#allocation2 + $0x1c8] sm:$0xff]
    %v970 = vld [vmem:[#allocation2 + $0x1e0] sm:$0xff]
    %v971 = vld [vmem:[#allocation2 + $0x1f8] sm:$0xff]
    %v972 = vld [vmem:[#allocation2 + $0x210] sm:$0xff]
    %v973 = vld [vmem:[#allocation2 + $0x228] sm:$0xff]
    %v974 = vld [vmem:[#allocation2 + $0x240] sm:$0xff]
    %v975 = vld [vmem:[#allocation2 + $0x258] sm:$0xff]
    %v976 = vld [vmem:[#allocation2 + $0x270] sm:$0xff]
    %v977 = vld [vmem:[#allocation2 + $0x288] sm:$0xff]
    %v978 = vld [vmem:[#allocation2 + $0x2a0] sm:$0xff]
    %v979 = vld [vmem:[#allocation2 + $0x2b8] sm:$0xff]
    %v980 = vld [vmem:[#allocation2 + $0x2d0] sm:$0xff]
    %v981 = vld [vmem:[#allocation2 + $0x2e8] sm:$0x3f]
    %v982 = vld [vmem:[#allocation2 + $0x300] sm:$0xff]
    %v983 = vld [vmem:[#allocation2 + $0x318] sm:$0xff]
    %v984 = vld [vmem:[#allocation2 + $0x330] sm:$0xff]
    %v985 = vld [vmem:[#allocation2 + $0x348] sm:$0xff]
    %v986 = vld [vmem:[#allocation2 + $0x360] sm:$0xff]
    %v987 = vld [vmem:[#allocation2 + $0x378] sm:$0xff]
    %v988 = vld [vmem:[#allocation2 + $0x390] sm:$0xff]
    %v989 = vld [vmem:[#allocation2 + $0x3a8] sm:$0xff]
    %v990 = vld [vmem:[#allocation2 + $0x3c0] sm:$0xff]
    %v991 = vld [vmem:[#allocation2 + $0x3d8] sm:$0xff]
    %v992 = vld [vmem:[#allocation2 + $0x3f0] sm:$0xff]
    %v993 = vld [vmem:[#allocation2 + $0x408] sm:$0xff]
    %v994 = vld [vmem:[#allocation2 + $0x420] sm:$0xff]
    %v995 = vld [vmem:[#allocation2 + $0x438] sm:$0xff]
    %v996 = vld [vmem:[#allocation2 + $0x450] sm:$0xff]
    %v997 = vld [vmem:[#allocation2 + $0x468] sm:$0xff]
    %v998 = vld [vmem:[#allocation2 + $0x480] sm:$0xff]
    %v999 = vld [vmem:[#allocation2 + $0x498] sm:$0xff]
    %v1000 = vld [vmem:[#allocation2 + $0x4b0] sm:$0xff]
    %v1001 = vld [vmem:[#allocation2 + $0x4c8] sm:$0xff]
    %v1002 = vld [vmem:[#allocation2 + $0x4e0] sm:$0xff]
    %v1003 = vld [vmem:[#allocation2 + $0x4f8] sm:$0xff]
    %v1004 = vld [vmem:[#allocation2 + $0x510] sm:$0xff]
    %v1005 = vld [vmem:[#allocation2 + $0x528] sm:$0xff]
    %v1006 = vld [vmem:[#allocation2 + $0x540] sm:$0xff]
    %v1007 = vld [vmem:[#allocation2 + $0x558] sm:$0xff]
    %v1008 = vld [vmem:[#allocation2 + $0x570] sm:$0xff]
    %v1009 = vld [vmem:[#allocation2 + $0x588] sm:$0xff]
    %v1010 = vld [vmem:[#allocation2 + $0x5a0] sm:$0xff]
    %v1011 = vld [vmem:[#allocation2 + $0x5b8] sm:$0xff]
    %v1012 = vld [vmem:[#allocation2 + $0x5d0] sm:$0xff]
    %v1013 = vld [vmem:[#allocation2 + $0x5e8] sm:$0x3f]
    %v1015 = vperm.slane %v949, 0
    %v1017 = vadd.f32 %v1015, %v950
    %v1018 = vadd.f32 %v1015, %v951
    %v1019 = vadd.f32 %v1015, %v952
    %v1020 = vadd.f32 %v1015, %v953
    %v1021 = vadd.f32 %v1015, %v954
    %v1022 = vadd.f32 %v1015, %v955
    %v1023 = vadd.f32 %v1015, %v956
    %v1024 = vadd.f32 %v1015, %v957
    %v1025 = vadd.f32 %v1015, %v958
    %v1026 = vadd.f32 %v1015, %v959
    %v1027 = vadd.f32 %v1015, %v960
    %v1028 = vadd.f32 %v1015, %v961
    %v1029 = vadd.f32 %v1015, %v962
    %v1030 = vadd.f32 %v1015, %v963
    %v1031 = vadd.f32 %v1015, %v964
    %v1032 = vadd.f32 %v1015, %v965
    %v1033 = vadd.f32 %v1015, %v966
    %v1034 = vadd.f32 %v1015, %v967
    %v1035 = vadd.f32 %v1015, %v968
    %v1036 = vadd.f32 %v1015, %v969
    %v1037 = vadd.f32 %v1015, %v970
    %v1038 = vadd.f32 %v1015, %v971
    %v1039 = vadd.f32 %v1015, %v972
    %v1040 = vadd.f32 %v1015, %v973
    %v1041 = vadd.f32 %v1015, %v974
    %v1042 = vadd.f32 %v1015, %v975
    %v1043 = vadd.f32 %v1015, %v976
    %v1044 = vadd.f32 %v1015, %v977
    %v1045 = vadd.f32 %v1015, %v978
    %v1046 = vadd.f32 %v1015, %v979
    %v1047 = vadd.f32 %v1015, %v980
    %v1048 = vadd.f32 %v1015, %v981
    %v1049 = vadd.f32 %v1015, %v982
    %v1050 = vadd.f32 %v1015, %v983
    %v1051 = vadd.f32 %v1015, %v984
    %v1052 = vadd.f32 %v1015, %v985
    %v1053 = vadd.f32 %v1015, %v986
    %v1054 = vadd.f32 %v1015, %v987
    %v1055 = vadd.f32 %v1015, %v988
    %v1056 = vadd.f32 %v1015, %v989
    %v1057 = vadd.f32 %v1015, %v990
    %v1058 = vadd.f32 %v1015, %v991
    %v1059 = vadd.f32 %v1015, %v992
    %v1060 = vadd.f32 %v1015, %v993
    %v1061 = vadd.f32 %v1015, %v994
    %v1062 = vadd.f32 %v1015, %v995
    %v1063 = vadd.f32 %v1015, %v996
    %v1064 = vadd.f32 %v1015, %v997
    %v1065 = vadd.f32 %v1015, %v998
    %v1066 = vadd.f32 %v1015, %v999
    %v1067 = vadd.f32 %v1015, %v1000
    %v1068 = vadd.f32 %v1015, %v1001
    %v1069 = vadd.f32 %v1015, %v1002
    %v1070 = vadd.f32 %v1015, %v1003
    %v1071 = vadd.f32 %v1015, %v1004
    %v1072 = vadd.f32 %v1015, %v1005
    %v1073 = vadd.f32 %v1015, %v1006
    %v1074 = vadd.f32 %v1015, %v1007
    %v1075 = vadd.f32 %v1015, %v1008
    %v1076 = vadd.f32 %v1015, %v1009
    %v1077 = vadd.f32 %v1015, %v1010
    %v1078 = vadd.f32 %v1015, %v1011
    %v1079 = vadd.f32 %v1015, %v1012
    %v1080 = vadd.f32 %v1015, %v1013
    %v1081 = vld [vmem:[#allocation2 + $0x8] sm:$0xfe]
    %v1082 = vld [vmem:[#allocation2 + $0x20] sm:$0xff]
    %v1083 = vld [vmem:[#allocation2 + $0x38] sm:$0xff]
    %v1084 = vld [vmem:[#allocation2 + $0x50] sm:$0xff]
    %v1085 = vld [vmem:[#allocation2 + $0x68] sm:$0xff]
    %v1086 = vld [vmem:[#allocation2 + $0x80] sm:$0xff]
    %v1087 = vld [vmem:[#allocation2 + $0x98] sm:$0xff]
    %v1088 = vld [vmem:[#allocation2 + $0xb0] sm:$0xff]
    %v1089 = vld [vmem:[#allocation2 + $0xc8] sm:$0xff]
    %v1090 = vld [vmem:[#allocation2 + $0xe0] sm:$0xff]
    %v1091 = vld [vmem:[#allocation2 + $0xf8] sm:$0xff]
    %v1092 = vld [vmem:[#allocation2 + $0x110] sm:$0xff]
    %v1093 = vld [vmem:[#allocation2 + $0x128] sm:$0xff]
    %v1094 = vld [vmem:[#allocation2 + $0x140] sm:$0xff]
    %v1095 = vld [vmem:[#allocation2 + $0x158] sm:$0xff]
    %v1096 = vld [vmem:[#allocation2 + $0x170] sm:$0xff]
    %v1097 = vld [vmem:[#allocation2 + $0x188] sm:$0xff]
    %v1098 = vld [vmem:[#allocation2 + $0x1a0] sm:$0xff]
    %v1099 = vld [vmem:[#allocation2 + $0x1b8] sm:$0xff]
    %v1100 = vld [vmem:[#allocation2 + $0x1d0] sm:$0xff]
    %v1101 = vld [vmem:[#allocation2 + $0x1e8] sm:$0xff]
    %v1102 = vld [vmem:[#allocation2 + $0x200] sm:$0xff]
    %v1103 = vld [vmem:[#allocation2 + $0x218] sm:$0xff]
    %v1104 = vld [vmem:[#allocation2 + $0x230] sm:$0xff]
    %v1105 = vld [vmem:[#allocation2 + $0x248] sm:$0xff]
    %v1106 = vld [vmem:[#allocation2 + $0x260] sm:$0xff]
    %v1107 = vld [vmem:[#allocation2 + $0x278] sm:$0xff]
    %v1108 = vld [vmem:[#allocation2 + $0x290] sm:$0xff]
    %v1109 = vld [vmem:[#allocation2 + $0x2a8] sm:$0xff]
    %v1110 = vld [vmem:[#allocation2 + $0x2c0] sm:$0xff]
    %v1111 = vld [vmem:[#allocation2 + $0x2d8] sm:$0xff]
    %v1112 = vld [vmem:[#allocation2 + $0x2f0] sm:$0x7f]
    %v1113 = vld [vmem:[#allocation2 + $0x308] sm:$0xfe]
    %v1114 = vld [vmem:[#allocation2 + $0x320] sm:$0xff]
    %v1115 = vld [vmem:[#allocation2 + $0x338] sm:$0xff]
    %v1116 = vld [vmem:[#allocation2 + $0x350] sm:$0xff]
    %v1117 = vld [vmem:[#allocation2 + $0x368] sm:$0xff]
    %v1118 = vld [vmem:[#allocation2 + $0x380] sm:$0xff]
    %v1119 = vld [vmem:[#allocation2 + $0x398] sm:$0xff]
    %v1120 = vld [vmem:[#allocation2 + $0x3b0] sm:$0xff]
    %v1121 = vld [vmem:[#allocation2 + $0x3c8] sm:$0xff]
    %v1122 = vld [vmem:[#allocation2 + $0x3e0] sm:$0xff]
    %v1123 = vld [vmem:[#allocation2 + $0x3f8] sm:$0xff]
    %v1124 = vld [vmem:[#allocation2 + $0x410] sm:$0xff]
    %v1125 = vld [vmem:[#allocation2 + $0x428] sm:$0xff]
    %v1126 = vld [vmem:[#allocation2 + $0x440] sm:$0xff]
    %v1127 = vld [vmem:[#allocation2 + $0x458] sm:$0xff]
    %v1128 = vld [vmem:[#allocation2 + $0x470] sm:$0xff]
    %v1129 = vld [vmem:[#allocation2 + $0x488] sm:$0xff]
    %v1130 = vld [vmem:[#allocation2 + $0x4a0] sm:$0xff]
    %v1131 = vld [vmem:[#allocation2 + $0x4b8] sm:$0xff]
    %v1132 = vld [vmem:[#allocation2 + $0x4d0] sm:$0xff]
    %v1133 = vld [vmem:[#allocation2 + $0x4e8] sm:$0xff]
    %v1134 = vld [vmem:[#allocation2 + $0x500] sm:$0xff]
    %v1135 = vld [vmem:[#allocation2 + $0x518] sm:$0xff]
    %v1136 = vld [vmem:[#allocation2 + $0x530] sm:$0xff]
    %v1137 = vld [vmem:[#allocation2 + $0x548] sm:$0xff]
    %v1138 = vld [vmem:[#allocation2 + $0x560] sm:$0xff]
    %v1139 = vld [vmem:[#allocation2 + $0x578] sm:$0xff]
    %v1140 = vld [vmem:[#allocation2 + $0x590] sm:$0xff]
    %v1141 = vld [vmem:[#allocation2 + $0x5a8] sm:$0xff]
    %v1142 = vld [vmem:[#allocation2 + $0x5c0] sm:$0xff]
    %v1143 = vld [vmem:[#allocation2 + $0x5d8] sm:$0xff]
    %v1144 = vld [vmem:[#allocation2 + $0x5f0] sm:$0x7f]
    %vm1209 = vcmask 1046528
    %v1210 = vrot.slane %v1081, 1
    %v1211 = vrot.slane %v1082, 1
    %v1212 = vsel %vm1209, %v1210, %v1211
    %v1213 = vrot.slane %v1083, 1
    %v1214 = vsel %vm1209, %v1211, %v1213
    %v1215 = vrot.slane %v1084, 1
    %v1216 = vsel %vm1209, %v1213, %v1215
    %v1217 = vrot.slane %v1085, 1
    %v1218 = vsel %vm1209, %v1215, %v1217
    %v1219 = vrot.slane %v1086, 1
    %v1220 = vsel %vm1209, %v1217, %v1219
    %v1221 = vrot.slane %v1087, 1
    %v1222 = vsel %vm1209, %v1219, %v1221
    %v1223 = vrot.slane %v1088, 1
    %v1224 = vsel %vm1209, %v1221, %v1223
    %v1225 = vrot.slane %v1089, 1
    %v1226 = vsel %vm1209, %v1223, %v1225
    %v1227 = vrot.slane %v1090, 1
    %v1228 = vsel %vm1209, %v1225, %v1227
    %v1229 = vrot.slane %v1091, 1
    %v1230 = vsel %vm1209, %v1227, %v1229
    %v1231 = vrot.slane %v1092, 1
    %v1232 = vsel %vm1209, %v1229, %v1231
    %v1233 = vrot.slane %v1093, 1
    %v1234 = vsel %vm1209, %v1231, %v1233
    %v1235 = vrot.slane %v1094, 1
    %v1236 = vsel %vm1209, %v1233, %v1235
    %v1237 = vrot.slane %v1095, 1
    %v1238 = vsel %vm1209, %v1235, %v1237
    %v1239 = vrot.slane %v1096, 1
    %v1240 = vsel %vm1209, %v1237, %v1239
    %v1241 = vrot.slane %v1097, 1
    %v1242 = vsel %vm1209, %v1239, %v1241
    %v1243 = vrot.slane %v1098, 1
    %v1244 = vsel %vm1209, %v1241, %v1243
    %v1245 = vrot.slane %v1099, 1
    %v1246 = vsel %vm1209, %v1243, %v1245
    %v1247 = vrot.slane %v1100, 1
    %v1248 = vsel %vm1209, %v1245, %v1247
    %v1249 = vrot.slane %v1101, 1
    %v1250 = vsel %vm1209, %v1247, %v1249
    %v1251 = vrot.slane %v1102, 1
    %v1252 = vsel %vm1209, %v1249, %v1251
    %v1253 = vrot.slane %v1103, 1
    %v1254 = vsel %vm1209, %v1251, %v1253
    %v1255 = vrot.slane %v1104, 1
    %v1256 = vsel %vm1209, %v1253, %v1255
    %v1257 = vrot.slane %v1105, 1
    %v1258 = vsel %vm1209, %v1255, %v1257
    %v1259 = vrot.slane %v1106, 1
    %v1260 = vsel %vm1209, %v1257, %v1259
    %v1261 = vrot.slane %v1107, 1
    %v1262 = vsel %vm1209, %v1259, %v1261
    %v1263 = vrot.slane %v1108, 1
    %v1264 = vsel %vm1209, %v1261, %v1263
    %v1265 = vrot.slane %v1109, 1
    %v1266 = vsel %vm1209, %v1263, %v1265
    %v1267 = vrot.slane %v1110, 1
    %v1268 = vsel %vm1209, %v1265, %v1267
    %v1269 = vrot.slane %v1111, 1
    %v1270 = vsel %vm1209, %v1267, %v1269
    %v1271 = vrot.slane %v1112, 1
    %v1272 = vsel %vm1209, %v1269, %v1271
    %v1273 = vrot.slane %v1113, 1
    %v1274 = vrot.slane %v1114, 1
    %v1275 = vsel %vm1209, %v1273, %v1274
    %v1276 = vrot.slane %v1115, 1
    %v1277 = vsel %vm1209, %v1274, %v1276
    %v1278 = vrot.slane %v1116, 1
    %v1279 = vsel %vm1209, %v1276, %v1278
    %v1280 = vrot.slane %v1117, 1
    %v1281 = vsel %vm1209, %v1278, %v1280
    %v1282 = vrot.slane %v1118, 1
    %v1283 = vsel %vm1209, %v1280, %v1282
    %v1284 = vrot.slane %v1119, 1
    %v1285 = vsel %vm1209, %v1282, %v1284
    %v1286 = vrot.slane %v1120, 1
    %v1287 = vsel %vm1209, %v1284, %v1286
    %v1288 = vrot.slane %v1121, 1
    %v1289 = vsel %vm1209, %v1286, %v1288
    %v1290 = vrot.slane %v1122, 1
    %v1291 = vsel %vm1209, %v1288, %v1290
    %v1292 = vrot.slane %v1123, 1
    %v1293 = vsel %vm1209, %v1290, %v1292
    %v1294 = vrot.slane %v1124, 1
    %v1295 = vsel %vm1209, %v1292, %v1294
    %v1296 = vrot.slane %v1125, 1
    %v1297 = vsel %vm1209, %v1294, %v1296
    %v1298 = vrot.slane %v1126, 1
    %v1299 = vsel %vm1209, %v1296, %v1298
    %v1300 = vrot.slane %v1127, 1
    %v1301 = vsel %vm1209, %v1298, %v1300
    %v1302 = vrot.slane %v1128, 1
    %v1303 = vsel %vm1209, %v1300, %v1302
    %v1304 = vrot.slane %v1129, 1
    %v1305 = vsel %vm1209, %v1302, %v1304
    %v1306 = vrot.slane %v1130, 1
    %v1307 = vsel %vm1209, %v1304, %v1306
    %v1308 = vrot.slane %v1131, 1
    %v1309 = vsel %vm1209, %v1306, %v1308
    %v1310 = vrot.slane %v1132, 1
    %v1311 = vsel %vm1209, %v1308, %v1310
    %v1312 = vrot.slane %v1133, 1
    %v1313 = vsel %vm1209, %v1310, %v1312
    %v1314 = vrot.slane %v1134, 1
    %v1315 = vsel %vm1209, %v1312, %v1314
    %v1316 = vrot.slane %v1135, 1
    %v1317 = vsel %vm1209, %v1314, %v1316
    %v1318 = vrot.slane %v1136, 1
    %v1319 = vsel %vm1209, %v1316, %v1318
    %v1320 = vrot.slane %v1137, 1
    %v1321 = vsel %vm1209, %v1318, %v1320
    %v1322 = vrot.slane %v1138, 1
    %v1323 = vsel %vm1209, %v1320, %v1322
    %v1324 = vrot.slane %v1139, 1
    %v1325 = vsel %vm1209, %v1322, %v1324
    %v1326 = vrot.slane %v1140, 1
    %v1327 = vsel %vm1209, %v1324, %v1326
    %v1328 = vrot.slane %v1141, 1
    %v1329 = vsel %vm1209, %v1326, %v1328
    %v1330 = vrot.slane %v1142, 1
    %v1331 = vsel %vm1209, %v1328, %v1330
    %v1332 = vrot.slane %v1143, 1
    %v1333 = vsel %vm1209, %v1330, %v1332
    %v1334 = vrot.slane %v1144, 1
    %v1335 = vsel %vm1209, %v1332, %v1334
    %v1400 = vadd.f32 %v1017, %v1212
    %v1401 = vadd.f32 %v1018, %v1214
    %v1402 = vadd.f32 %v1019, %v1216
    %v1403 = vadd.f32 %v1020, %v1218
    %v1404 = vadd.f32 %v1021, %v1220
    %v1405 = vadd.f32 %v1022, %v1222
    %v1406 = vadd.f32 %v1023, %v1224
    %v1407 = vadd.f32 %v1024, %v1226
    %v1408 = vadd.f32 %v1025, %v1228
    %v1409 = vadd.f32 %v1026, %v1230
    %v1410 = vadd.f32 %v1027, %v1232
    %v1411 = vadd.f32 %v1028, %v1234
    %v1412 = vadd.f32 %v1029, %v1236
    %v1413 = vadd.f32 %v1030, %v1238
    %v1414 = vadd.f32 %v1031, %v1240
    %v1415 = vadd.f32 %v1032, %v1242
    %v1416 = vadd.f32 %v1033, %v1244
    %v1417 = vadd.f32 %v1034, %v1246
    %v1418 = vadd.f32 %v1035, %v1248
    %v1419 = vadd.f32 %v1036, %v1250
    %v1420 = vadd.f32 %v1037, %v1252
    %v1421 = vadd.f32 %v1038, %v1254
    %v1422 = vadd.f32 %v1039, %v1256
    %v1423 = vadd.f32 %v1040, %v1258
    %v1424 = vadd.f32 %v1041, %v1260
    %v1425 = vadd.f32 %v1042, %v1262
    %v1426 = vadd.f32 %v1043, %v1264
    %v1427 = vadd.f32 %v1044, %v1266
    %v1428 = vadd.f32 %v1045, %v1268
    %v1429 = vadd.f32 %v1046, %v1270
    %v1430 = vadd.f32 %v1047, %v1272
    %v1431 = vadd.f32 %v1048, %v1271
    %v1432 = vadd.f32 %v1049, %v1275
    %v1433 = vadd.f32 %v1050, %v1277
    %v1434 = vadd.f32 %v1051, %v1279
    %v1435 = vadd.f32 %v1052, %v1281
    %v1436 = vadd.f32 %v1053, %v1283
    %v1437 = vadd.f32 %v1054, %v1285
    %v1438 = vadd.f32 %v1055, %v1287
    %v1439 = vadd.f32 %v1056, %v1289
    %v1440 = vadd.f32 %v1057, %v1291
    %v1441 = vadd.f32 %v1058, %v1293
    %v1442 = vadd.f32 %v1059, %v1295
    %v1443 = vadd.f32 %v1060, %v1297
    %v1444 = vadd.f32 %v1061, %v1299
    %v1445 = vadd.f32 %v1062, %v1301
    %v1446 = vadd.f32 %v1063, %v1303
    %v1447 = vadd.f32 %v1064, %v1305
    %v1448 = vadd.f32 %v1065, %v1307
    %v1449 = vadd.f32 %v1066, %v1309
    %v1450 = vadd.f32 %v1067, %v1311
    %v1451 = vadd.f32 %v1068, %v1313
    %v1452 = vadd.f32 %v1069, %v1315
    %v1453 = vadd.f32 %v1070, %v1317
    %v1454 = vadd.f32 %v1071, %v1319
    %v1455 = vadd.f32 %v1072, %v1321
    %v1456 = vadd.f32 %v1073, %v1323
    %v1457 = vadd.f32 %v1074, %v1325
    %v1458 = vadd.f32 %v1075, %v1327
    %v1459 = vadd.f32 %v1076, %v1329
    %v1460 = vadd.f32 %v1077, %v1331
    %v1461 = vadd.f32 %v1078, %v1333
    %v1462 = vadd.f32 %v1079, %v1335
    %v1463 = vadd.f32 %v1080, %v1334
    %v1464 = vld [vmem:[#allocation2 + $0x10] sm:$0xfc]
    %v1465 = vld [vmem:[#allocation2 + $0x28] sm:$0xff]
    %v1466 = vld [vmem:[#allocation2 + $0x40] sm:$0xff]
    %v1467 = vld [vmem:[#allocation2 + $0x58] sm:$0xff]
    %v1468 = vld [vmem:[#allocation2 + $0x70] sm:$0xff]
    %v1469 = vld [vmem:[#allocation2 + $0x88] sm:$0xff]
    %v1470 = vld [vmem:[#allocation2 + $0xa0] sm:$0xff]
    %v1471 = vld [vmem:[#allocation2 + $0xb8] sm:$0xff]
    %v1472 = vld [vmem:[#allocation2 + $0xd0] sm:$0xff]
    %v1473 = vld [vmem:[#allocation2 + $0xe8] sm:$0xff]
    %v1474 = vld [vmem:[#allocation2 + $0x100] sm:$0xff]
    %v1475 = vld [vmem:[#allocation2 + $0x118] sm:$0xff]
    %v1476 = vld [vmem:[#allocation2 + $0x130] sm:$0xff]
    %v1477 = vld [vmem:[#allocation2 + $0x148] sm:$0xff]
    %v1478 = vld [vmem:[#allocation2 + $0x160] sm:$0xff]
    %v1479 = vld [vmem:[#allocation2 + $0x178] sm:$0xff]
    %v1480 = vld [vmem:[#allocation2 + $0x190] sm:$0xff]
    %v1481 = vld [vmem:[#allocation2 + $0x1a8] sm:$0xff]
    %v1482 = vld [vmem:[#allocation2 + $0x1c0] sm:$0xff]
    %v1483 = vld [vmem:[#allocation2 + $0x1d8] sm:$0xff]
    %v1484 = vld [vmem:[#allocation2 + $0x1f0] sm:$0xff]
    %v1485 = vld [vmem:[#allocation2 + $0x208] sm:$0xff]
    %v1486 = vld [vmem:[#allocation2 + $0x220] sm:$0xff]
    %v1487 = vld [vmem:[#allocation2 + $0x238] sm:$0xff]
    %v1488 = vld [vmem:[#allocation2 + $0x250] sm:$0xff]
    %v1489 = vld [vmem:[#allocation2 + $0x268] sm:$0xff]
    %v1490 = vld [vmem:[#allocation2 + $0x280] sm:$0xff]
    %v1491 = vld [vmem:[#allocation2 + $0x298] sm:$0xff]
    %v1492 = vld [vmem:[#allocation2 + $0x2b0] sm:$0xff]
    %v1493 = vld [vmem:[#allocation2 + $0x2c8] sm:$0xff]
    %v1494 = vld [vmem:[#allocation2 + $0x2e0] sm:$0xff]
    %v1495 = vld [vmem:[#allocation2 + $0x2f8] sm:$0xff]
    %v1496 = vld [vmem:[#allocation2 + $0x310] sm:$0xfc]
    %v1497 = vld [vmem:[#allocation2 + $0x328] sm:$0xff]
    %v1498 = vld [vmem:[#allocation2 + $0x340] sm:$0xff]
    %v1499 = vld [vmem:[#allocation2 + $0x358] sm:$0xff]
    %v1500 = vld [vmem:[#allocation2 + $0x370] sm:$0xff]
    %v1501 = vld [vmem:[#allocation2 + $0x388] sm:$0xff]
    %v1502 = vld [vmem:[#allocation2 + $0x3a0] sm:$0xff]
    %v1503 = vld [vmem:[#allocation2 + $0x3b8] sm:$0xff]
    %v1504 = vld [vmem:[#allocation2 + $0x3d0] sm:$0xff]
    %v1505 = vld [vmem:[#allocation2 + $0x3e8] sm:$0xff]
    %v1506 = vld [vmem:[#allocation2 + $0x400] sm:$0xff]
    %v1507 = vld [vmem:[#allocation2 + $0x418] sm:$0xff]
    %v1508 = vld [vmem:[#allocation2 + $0x430] sm:$0xff]
    %v1509 = vld [vmem:[#allocation2 + $0x448] sm:$0xff]
    %v1510 = vld [vmem:[#allocation2 + $0x460] sm:$0xff]
    %v1511 = vld [vmem:[#allocation2 + $0x478] sm:$0xff]
    %v1512 = vld [vmem:[#allocation2 + $0x490] sm:$0xff]
    %v1513 = vld [vmem:[#allocation2 + $0x4a8] sm:$0xff]
    %v1514 = vld [vmem:[#allocation2 + $0x4c0] sm:$0xff]
    %v1515 = vld [vmem:[#allocation2 + $0x4d8] sm:$0xff]
    %v1516 = vld [vmem:[#allocation2 + $0x4f0] sm:$0xff]
    %v1517 = vld [vmem:[#allocation2 + $0x508] sm:$0xff]
    %v1518 = vld [vmem:[#allocation2 + $0x520] sm:$0xff]
    %v1519 = vld [vmem:[#allocation2 + $0x538] sm:$0xff]
    %v1520 = vld [vmem:[#allocation2 + $0x550] sm:$0xff]
    %v1521 = vld [vmem:[#allocation2 + $0x568] sm:$0xff]
    %v1522 = vld [vmem:[#allocation2 + $0x580] sm:$0xff]
    %v1523 = vld [vmem:[#allocation2 + $0x598] sm:$0xff]
    %v1524 = vld [vmem:[#allocation2 + $0x5b0] sm:$0xff]
    %v1525 = vld [vmem:[#allocation2 + $0x5c8] sm:$0xff]
    %v1526 = vld [vmem:[#allocation2 + $0x5e0] sm:$0xff]
    %v1527 = vld [vmem:[#allocation2 + $0x5f8] sm:$0xff]
    %vm1592 = vcmask 1045504
    %v1593 = vrot.slane %v1464, 2
    %v1594 = vrot.slane %v1465, 2
    %v1595 = vsel %vm1592, %v1593, %v1594
    %v1596 = vrot.slane %v1466, 2
    %v1597 = vsel %vm1592, %v1594, %v1596
    %v1598 = vrot.slane %v1467, 2
    %v1599 = vsel %vm1592, %v1596, %v1598
    %v1600 = vrot.slane %v1468, 2
    %v1601 = vsel %vm1592, %v1598, %v1600
    %v1602 = vrot.slane %v1469, 2
    %v1603 = vsel %vm1592, %v1600, %v1602
    %v1604 = vrot.slane %v1470, 2
    %v1605 = vsel %vm1592, %v1602, %v1604
    %v1606 = vrot.slane %v1471, 2
    %v1607 = vsel %vm1592, %v1604, %v1606
    %v1608 = vrot.slane %v1472, 2
    %v1609 = vsel %vm1592, %v1606, %v1608
    %v1610 = vrot.slane %v1473, 2
    %v1611 = vsel %vm1592, %v1608, %v1610
    %v1612 = vrot.slane %v1474, 2
    %v1613 = vsel %vm1592, %v1610, %v1612
    %v1614 = vrot.slane %v1475, 2
    %v1615 = vsel %vm1592, %v1612, %v1614
    %v1616 = vrot.slane %v1476, 2
    %v1617 = vsel %vm1592, %v1614, %v1616
    %v1618 = vrot.slane %v1477, 2
    %v1619 = vsel %vm1592, %v1616, %v1618
    %v1620 = vrot.slane %v1478, 2
    %v1621 = vsel %vm1592, %v1618, %v1620
    %v1622 = vrot.slane %v1479, 2
    %v1623 = vsel %vm1592, %v1620, %v1622
    %v1624 = vrot.slane %v1480, 2
    %v1625 = vsel %vm1592, %v1622, %v1624
    %v1626 = vrot.slane %v1481, 2
    %v1627 = vsel %vm1592, %v1624, %v1626
    %v1628 = vrot.slane %v1482, 2
    %v1629 = vsel %vm1592, %v1626, %v1628
    %v1630 = vrot.slane %v1483, 2
    %v1631 = vsel %vm1592, %v1628, %v1630
    %v1632 = vrot.slane %v1484, 2
    %v1633 = vsel %vm1592, %v1630, %v1632
    %v1634 = vrot.slane %v1485, 2
    %v1635 = vsel %vm1592, %v1632, %v1634
    %v1636 = vrot.slane %v1486, 2
    %v1637 = vsel %vm1592, %v1634, %v1636
    %v1638 = vrot.slane %v1487, 2
    %v1639 = vsel %vm1592, %v1636, %v1638
    %v1640 = vrot.slane %v1488, 2
    %v1641 = vsel %vm1592, %v1638, %v1640
    %v1642 = vrot.slane %v1489, 2
    %v1643 = vsel %vm1592, %v1640, %v1642
    %v1644 = vrot.slane %v1490, 2
    %v1645 = vsel %vm1592, %v1642, %v1644
    %v1646 = vrot.slane %v1491, 2
    %v1647 = vsel %vm1592, %v1644, %v1646
    %v1648 = vrot.slane %v1492, 2
    %v1649 = vsel %vm1592, %v1646, %v1648
    %v1650 = vrot.slane %v1493, 2
    %v1651 = vsel %vm1592, %v1648, %v1650
    %v1652 = vrot.slane %v1494, 2
    %v1653 = vsel %vm1592, %v1650, %v1652
    %v1654 = vrot.slane %v1495, 2
    %v1655 = vsel %vm1592, %v1652, %v1654
    %v1656 = vrot.slane %v1496, 2
    %v1657 = vrot.slane %v1497, 2
    %v1658 = vsel %vm1592, %v1656, %v1657
    %v1659 = vrot.slane %v1498, 2
    %v1660 = vsel %vm1592, %v1657, %v1659
    %v1661 = vrot.slane %v1499, 2
    %v1662 = vsel %vm1592, %v1659, %v1661
    %v1663 = vrot.slane %v1500, 2
    %v1664 = vsel %vm1592, %v1661, %v1663
    %v1665 = vrot.slane %v1501, 2
    %v1666 = vsel %vm1592, %v1663, %v1665
    %v1667 = vrot.slane %v1502, 2
    %v1668 = vsel %vm1592, %v1665, %v1667
    %v1669 = vrot.slane %v1503, 2
    %v1670 = vsel %vm1592, %v1667, %v1669
    %v1671 = vrot.slane %v1504, 2
    %v1672 = vsel %vm1592, %v1669, %v1671
    %v1673 = vrot.slane %v1505, 2
    %v1674 = vsel %vm1592, %v1671, %v1673
    %v1675 = vrot.slane %v1506, 2
    %v1676 = vsel %vm1592, %v1673, %v1675
    %v1677 = vrot.slane %v1507, 2
    %v1678 = vsel %vm1592, %v1675, %v1677
    %v1679 = vrot.slane %v1508, 2
    %v1680 = vsel %vm1592, %v1677, %v1679
    %v1681 = vrot.slane %v1509, 2
    %v1682 = vsel %vm1592, %v1679, %v1681
    %v1683 = vrot.slane %v1510, 2
    %v1684 = vsel %vm1592, %v1681, %v1683
    %v1685 = vrot.slane %v1511, 2
    %v1686 = vsel %vm1592, %v1683, %v1685
    %v1687 = vrot.slane %v1512, 2
    %v1688 = vsel %vm1592, %v1685, %v1687
    %v1689 = vrot.slane %v1513, 2
    %v1690 = vsel %vm1592, %v1687, %v1689
    %v1691 = vrot.slane %v1514, 2
    %v1692 = vsel %vm1592, %v1689, %v1691
    %v1693 = vrot.slane %v1515, 2
    %v1694 = vsel %vm1592, %v1691, %v1693
    %v1695 = vrot.slane %v1516, 2
    %v1696 = vsel %vm1592, %v1693, %v1695
    %v1697 = vrot.slane %v1517, 2
    %v1698 = vsel %vm1592, %v1695, %v1697
    %v1699 = vrot.slane %v1518, 2
    %v1700 = vsel %vm1592, %v1697, %v1699
    %v1701 = vrot.slane %v1519, 2
    %v1702 = vsel %vm1592, %v1699, %v1701
    %v1703 = vrot.slane %v1520, 2
    %v1704 = vsel %vm1592, %v1701, %v1703
    %v1705 = vrot.slane %v1521, 2
    %v1706 = vsel %vm1592, %v1703, %v1705
    %v1707 = vrot.slane %v1522, 2
    %v1708 = vsel %vm1592, %v1705, %v1707
    %v1709 = vrot.slane %v1523, 2
    %v1710 = vsel %vm1592, %v1707, %v1709
    %v1711 = vrot.slane %v1524, 2
    %v1712 = vsel %vm1592, %v1709, %v1711
    %v1713 = vrot.slane %v1525, 2
    %v1714 = vsel %vm1592, %v1711, %v1713
    %v1715 = vrot.slane %v1526, 2
    %v1716 = vsel %vm1592, %v1713, %v1715
    %v1717 = vrot.slane %v1527, 2
    %v1718 = vsel %vm1592, %v1715, %v1717
    %v1783 = vadd.f32 %v1400, %v1595
    %v1784 = vadd.f32 %v1401, %v1597
    %v1785 = vadd.f32 %v1402, %v1599
    %v1786 = vadd.f32 %v1403, %v1601
    %v1787 = vadd.f32 %v1404, %v1603
    %v1788 = vadd.f32 %v1405, %v1605
    %v1789 = vadd.f32 %v1406, %v1607
    %v1790 = vadd.f32 %v1407, %v1609
    %v1791 = vadd.f32 %v1408, %v1611
    %v1792 = vadd.f32 %v1409, %v1613
    %v1793 = vadd.f32 %v1410, %v1615
    %v1794 = vadd.f32 %v1411, %v1617
    %v1795 = vadd.f32 %v1412, %v1619
    %v1796 = vadd.f32 %v1413, %v1621
    %v1797 = vadd.f32 %v1414, %v1623
    %v1798 = vadd.f32 %v1415, %v1625
    %v1799 = vadd.f32 %v1416, %v1627
    %v1800 = vadd.f32 %v1417, %v1629
    %v1801 = vadd.f32 %v1418, %v1631
    %v1802 = vadd.f32 %v1419, %v1633
    %v1803 = vadd.f32 %v1420, %v1635
    %v1804 = vadd.f32 %v1421, %v1637
    %v1805 = vadd.f32 %v1422, %v1639
    %v1806 = vadd.f32 %v1423, %v1641
    %v1807 = vadd.f32 %v1424, %v1643
    %v1808 = vadd.f32 %v1425, %v1645
    %v1809 = vadd.f32 %v1426, %v1647
    %v1810 = vadd.f32 %v1427, %v1649
    %v1811 = vadd.f32 %v1428, %v1651
    %v1812 = vadd.f32 %v1429, %v1653
    %v1813 = vadd.f32 %v1430, %v1655
    %v1814 = vadd.f32 %v1431, %v1654
    %v1815 = vadd.f32 %v1432, %v1658
    %v1816 = vadd.f32 %v1433, %v1660
    %v1817 = vadd.f32 %v1434, %v1662
    %v1818 = vadd.f32 %v1435, %v1664
    %v1819 = vadd.f32 %v1436, %v1666
    %v1820 = vadd.f32 %v1437, %v1668
    %v1821 = vadd.f32 %v1438, %v1670
    %v1822 = vadd.f32 %v1439, %v1672
    %v1823 = vadd.f32 %v1440, %v1674
    %v1824 = vadd.f32 %v1441, %v1676
    %v1825 = vadd.f32 %v1442, %v1678
    %v1826 = vadd.f32 %v1443, %v1680
    %v1827 = vadd.f32 %v1444, %v1682
    %v1828 = vadd.f32 %v1445, %v1684
    %v1829 = vadd.f32 %v1446, %v1686
    %v1830 = vadd.f32 %v1447, %v1688
    %v1831 = vadd.f32 %v1448, %v1690
    %v1832 = vadd.f32 %v1449, %v1692
    %v1833 = vadd.f32 %v1450, %v1694
    %v1834 = vadd.f32 %v1451, %v1696
    %v1835 = vadd.f32 %v1452, %v1698
    %v1836 = vadd.f32 %v1453, %v1700
    %v1837 = vadd.f32 %v1454, %v1702
    %v1838 = vadd.f32 %v1455, %v1704
    %v1839 = vadd.f32 %v1456, %v1706
    %v1840 = vadd.f32 %v1457, %v1708
    %v1841 = vadd.f32 %v1458, %v1710
    %v1842 = vadd.f32 %v1459, %v1712
    %v1843 = vadd.f32 %v1460, %v1714
    %v1844 = vadd.f32 %v1461, %v1716
    %v1845 = vadd.f32 %v1462, %v1718
    %v1846 = vadd.f32 %v1463, %v1717
    %1847 = vst [vmem:[#allocation3 + $0x1] sm:$0xff] %v1783
    %1848 = vst [vmem:[#allocation3 + $0x9] sm:$0xff] %v1784
    %1849 = vst [vmem:[#allocation3 + $0x11] sm:$0xff] %v1785
    %1850 = vst [vmem:[#allocation3 + $0x19] sm:$0xff] %v1786
    %1851 = vst [vmem:[#allocation3 + $0x21] sm:$0xff] %v1787
    %1852 = vst [vmem:[#allocation3 + $0x29] sm:$0xff] %v1788
    %1853 = vst [vmem:[#allocation3 + $0x31] sm:$0xff] %v1789
    %1854 = vst [vmem:[#allocation3 + $0x39] sm:$0xff] %v1790
    %1855 = vst [vmem:[#allocation3 + $0x41] sm:$0xff] %v1791
    %1856 = vst [vmem:[#allocation3 + $0x49] sm:$0xff] %v1792
    %1857 = vst [vmem:[#allocation3 + $0x51] sm:$0xff] %v1793
    %1858 = vst [vmem:[#allocation3 + $0x59] sm:$0xff] %v1794
    %1859 = vst [vmem:[#allocation3 + $0x61] sm:$0xff] %v1795
    %1860 = vst [vmem:[#allocation3 + $0x69] sm:$0xff] %v1796
    %1861 = vst [vmem:[#allocation3 + $0x71] sm:$0xff] %v1797
    %1862 = vst [vmem:[#allocation3 + $0x79] sm:$0xff] %v1798
    %1863 = vst [vmem:[#allocation3 + $0x81] sm:$0xff] %v1799
    %1864 = vst [vmem:[#allocation3 + $0x89] sm:$0xff] %v1800
    %1865 = vst [vmem:[#allocation3 + $0x91] sm:$0xff] %v1801
    %1866 = vst [vmem:[#allocation3 + $0x99] sm:$0xff] %v1802
    %1867 = vst [vmem:[#allocation3 + $0xa1] sm:$0xff] %v1803
    %1868 = vst [vmem:[#allocation3 + $0xa9] sm:$0xff] %v1804
    %1869 = vst [vmem:[#allocation3 + $0xb1] sm:$0xff] %v1805
    %1870 = vst [vmem:[#allocation3 + $0xb9] sm:$0xff] %v1806
    %1871 = vst [vmem:[#allocation3 + $0xc1] sm:$0xff] %v1807
    %1872 = vst [vmem:[#allocation3 + $0xc9] sm:$0xff] %v1808
    %1873 = vst [vmem:[#allocation3 + $0xd1] sm:$0xff] %v1809
    %1874 = vst [vmem:[#allocation3 + $0xd9] sm:$0xff] %v1810
    %1875 = vst [vmem:[#allocation3 + $0xe1] sm:$0xff] %v1811
    %1876 = vst [vmem:[#allocation3 + $0xe9] sm:$0xff] %v1812
    %1877 = vst [vmem:[#allocation3 + $0xf1] sm:$0xff] %v1813
    %1878 = vst [vmem:[#allocation3 + $0xf9] sm:$0x3f] %v1814
    %1879 = vst [vmem:[#allocation3 + $0x101] sm:$0xff] %v1815
    %1880 = vst [vmem:[#allocation3 + $0x109] sm:$0xff] %v1816
    %1881 = vst [vmem:[#allocation3 + $0x111] sm:$0xff] %v1817
    %1882 = vst [vmem:[#allocation3 + $0x119] sm:$0xff] %v1818
    %1883 = vst [vmem:[#allocation3 + $0x121] sm:$0xff] %v1819
    %1884 = vst [vmem:[#allocation3 + $0x129] sm:$0xff] %v1820
    %1885 = vst [vmem:[#allocation3 + $0x131] sm:$0xff] %v1821
    %1886 = vst [vmem:[#allocation3 + $0x139] sm:$0xff] %v1822
    %1887 = vst [vmem:[#allocation3 + $0x141] sm:$0xff] %v1823
    %1888 = vst [vmem:[#allocation3 + $0x149] sm:$0xff] %v1824
    %1889 = vst [vmem:[#allocation3 + $0x151] sm:$0xff] %v1825
    %1890 = vst [vmem:[#allocation3 + $0x159] sm:$0xff] %v1826
    %1891 = vst [vmem:[#allocation3 + $0x161] sm:$0xff] %v1827
    %1892 = vst [vmem:[#allocation3 + $0x169] sm:$0xff] %v1828
    %1893 = vst [vmem:[#allocation3 + $0x171] sm:$0xff] %v1829
    %1894 = vst [vmem:[#allocation3 + $0x179] sm:$0xff] %v1830
    %1895 = vst [vmem:[#allocation3 + $0x181] sm:$0xff] %v1831
    %1896 = vst [vmem:[#allocation3 + $0x189] sm:$0xff] %v1832
    %1897 = vst [vmem:[#allocation3 + $0x191] sm:$0xff] %v1833
    %1898 = vst [vmem:[#allocation3 + $0x199] sm:$0xff] %v1834
    %1899 = vst [vmem:[#allocation3 + $0x1a1] sm:$0xff] %v1835
    %1900 = vst [vmem:[#allocation3 + $0x1a9] sm:$0xff] %v1836
    %1901 = vst [vmem:[#allocation3 + $0x1b1] sm:$0xff] %v1837
    %1902 = vst [vmem:[#allocation3 + $0x1b9] sm:$0xff] %v1838
    %1903 = vst [vmem:[#allocation3 + $0x1c1] sm:$0xff] %v1839
    %1904 = vst [vmem:[#allocation3 + $0x1c9] sm:$0xff] %v1840
    %1905 = vst [vmem:[#allocation3 + $0x1d1] sm:$0xff] %v1841
    %1906 = vst [vmem:[#allocation3 + $0x1d9] sm:$0xff] %v1842
    %1907 = vst [vmem:[#allocation3 + $0x1e1] sm:$0xff] %v1843
    %1908 = vst [vmem:[#allocation3 + $0x1e9] sm:$0xff] %v1844
    %1909 = vst [vmem:[#allocation3 + $0x1f1] sm:$0xff] %v1845
    %1910 = vst [vmem:[#allocation3 + $0x1f9] sm:$0x3f] %v1846
    %v1911 = vld [vmem:[%s1] sm:$0x1]
    %v1912 = vld [vmem:[%s1 + $0x2] sm:$0x1]
    %v1913 = vld [vmem:[%s2] sm:$0xff]
    %v1914 = vld [vmem:[%s2 + $0x18] sm:$0xff]
    %v1915 = vld [vmem:[%s2 + $0x30] sm:$0xff]
    %v1916 = vld [vmem:[%s2 + $0x48] sm:$0xff]
    %v1917 = vld [vmem:[%s2 + $0x60] sm:$0xff]
    %v1918 = vld [vmem:[%s2 + $0x78] sm:$0xff]
    %v1919 = vld [vmem:[%s2 + $0x90] sm:$0xff]
    %v1920 = vld [vmem:[%s2 + $0xa8] sm:$0xff]
    %v1921 = vld [vmem:[%s2 + $0xc0] sm:$0xff]
    %v1922 = vld [vmem:[%s2 + $0xd8] sm:$0xff]
    %v1923 = vld [vmem:[%s2 + $0xf0] sm:$0xff]
    %v1924 = vld [vmem:[%s2 + $0x108] sm:$0xff]
    %v1925 = vld [vmem:[%s2 + $0x120] sm:$0xff]
    %v1926 = vld [vmem:[%s2 + $0x138] sm:$0xff]
    %v1927 = vld [vmem:[%s2 + $0x150] sm:$0xff]
    %v1928 = vld [vmem:[%s2 + $0x168] sm:$0xff]
    %v1931 = vrot.slane %v1912, 7
    %vm1932 = vcmask 1041409
    %v1933 = vsel %vm1932, %v1931, %v1911
    %1935 = vmatpush.msra.mxu0 %v1928
    %1936 = vmatpush.msra.mxu0 %v1927
    %1937 = vmatpush.msra.mxu0 %v1926
    %1938 = vmatpush.msra.mxu0 %v1925
    %1939 = vmatpush.msra.mxu0 %v1924
    %1940 = vmatpush.msra.mxu0 %v1923
    %1941 = vmatpush.msra.mxu0 %v1922
    %1942 = vmatpush.msra.mxu0 %v1921
    %1943 = vmatpush.msra.mxu0 %v1920
    %1944 = vmatpush.msra.mxu0 %v1919
    %1945 = vmatpush.msra.mxu0 %v1918
    %1946 = vmatpush.msra.mxu0 %v1917
    %1947 = vmatpush.msra.mxu0 %v1916
    %1948 = vmatpush.msra.mxu0 %v1915
    %1949 = vmatpush.msra.mxu0 %v1914
    %1950 = vmatpush.msra.mxu0 %v1913
    %1951 = vmatmul.f32.gmra.mxu0 %v1933
    %v1952 = vpop.f32.mrf.mxu0
    %v1953 = vadd.f32 0.0, %v1952
    %1954 = vdwg.mxu0
    %v1956 = vrot.slane %v1953, 1
    %v1958 = vadd.f32 %v949, %v1953
    %v1959 = vadd.f32 %v949, %v1956
    %v1960 = vld [vmem:[#allocation2 + $0x8] ss:$0 sm:$0xff]
    %v1961 = vld [vmem:[#allocation2 + $0x308] ss:$0 sm:$0xff]
    %v1962 = vadd.f32 %v1958, %v1960
    %v1963 = vadd.f32 %v1959, %v1961
    %v1964 = vld [vmem:[#allocation2 + $0x11] ss:$0 sm:$0xff]
    %v1965 = vld [vmem:[#allocation2 + $0x311] ss:$0 sm:$0xff]
    %v1966 = vadd.f32 %v1962, %v1964
    %v1967 = vadd.f32 %v1963, %v1965
    %1968 = vst [vmem:[#allocation3] sm:$0x1] %v1966
    %1969 = vst [vmem:[#allocation3 + $0x100] sm:$0x1] %v1967
    %v1970 = vld [vmem:[#allocation2 + $0x2ee] ss:$0 sm:$0xff]
    %v1971 = vld [vmem:[#allocation2 + $0x5ee] ss:$0 sm:$0xff]
    %v1972 = vadd.f32 %v949, %v1970
    %v1973 = vadd.f32 %v949, %v1971
    %v1974 = vld [vmem:[#allocation2 + $0x2f7] ss:$0 sm:$0xff]
    %v1975 = vld [vmem:[#allocation2 + $0x5f7] ss:$0 sm:$0xff]
    %v1976 = vadd.f32 %v1972, %v1974
    %v1977 = vadd.f32 %v1973, %v1975
    %v1978 = vld [vmem:[%s1 + $0x1] sm:$0x1]
    %v1979 = vld [vmem:[%s1 + $0x3] sm:$0x1]
    %v1980 = vld [vmem:[%s2 + $0x10] sm:$0xff]
    %v1981 = vld [vmem:[%s2 + $0x28] sm:$0xff]
    %v1982 = vld [vmem:[%s2 + $0x40] sm:$0xff]
    %v1983 = vld [vmem:[%s2 + $0x58] sm:$0xff]
    %v1984 = vld [vmem:[%s2 + $0x70] sm:$0xff]
    %v1985 = vld [vmem:[%s2 + $0x88] sm:$0xff]
    %v1986 = vld [vmem:[%s2 + $0xa0] sm:$0xff]
    %v1987 = vld [vmem:[%s2 + $0xb8] sm:$0xff]
    %v1988 = vld [vmem:[%s2 + $0xd0] sm:$0xff]
    %v1989 = vld [vmem:[%s2 + $0xe8] sm:$0xff]
    %v1990 = vld [vmem:[%s2 + $0x100] sm:$0xff]
    %v1991 = vld [vmem:[%s2 + $0x118] sm:$0xff]
    %v1992 = vld [vmem:[%s2 + $0x130] sm:$0xff]
    %v1993 = vld [vmem:[%s2 + $0x148] sm:$0xff]
    %v1994 = vld [vmem:[%s2 + $0x160] sm:$0xff]
    %v1995 = vld [vmem:[%s2 + $0x178] sm:$0xff]
    %v1998 = vrot.slane %v1979, 7
    %v1999 = vsel %vm1932, %v1998, %v1978
    %2001 = vmatpush.msra.mxu0 %v1995
    %2002 = vmatpush.msra.mxu0 %v1994
    %2003 = vmatpush.msra.mxu0 %v1993
    %2004 = vmatpush.msra.mxu0 %v1992
    %2005 = vmatpush.msra.mxu0 %v1991
    %2006 = vmatpush.msra.mxu0 %v1990
    %2007 = vmatpush.msra.mxu0 %v1989
    %2008 = vmatpush.msra.mxu0 %v1988
    %2009 = vmatpush.msra.mxu0 %v1987
    %2010 = vmatpush.msra.mxu0 %v1986
    %2011 = vmatpush.msra.mxu0 %v1985
    %2012 = vmatpush.msra.mxu0 %v1984
    %2013 = vmatpush.msra.mxu0 %v1983
    %2014 = vmatpush.msra.mxu0 %v1982
    %2015 = vmatpush.msra.mxu0 %v1981
    %2016 = vmatpush.msra.mxu0 %v1980
    %2017 = vmatmul.f32.gmra.mxu0 %v1999
    %v2018 = vpop.f32.mrf.mxu0
    %v2019 = vadd.f32 0.0, %v2018
    %2020 = vdwg.mxu0
    %v2022 = vrot.slane %v2019, 1
    %v2024 = vadd.f32 %v1976, %v2019
    %v2025 = vadd.f32 %v1977, %v2022
    %2026 = vst [vmem:[#allocation3 + $0xff] sm:$0x1] %v2024
    %2027 = vst [vmem:[#allocation3 + $0x1ff] sm:$0x1] %v2025
    // Predicated region
    $region18: #{conv_layer_forward.1} parent=1 // pred_check
      _
    $region19: #{conv_layer_forward.1} parent=1 // pred_check_branch
      %2029 = sbr.rel (0) target = $region21
    $region20: #{conv_layer_forward.1} parent=1 // pred_region
      %2031 = vsyncadd [#allocation4], 0
      %s2032 = sshll.u32 [#allocation3], 4
      %s2033 = int_to_ptr.vmem [resolvable:$true] %s2032
      %s2034 = sshll.u32 %s4, 4
      %s2035 = int_to_ptr.hbm [resolvable:$true] %s2034
      %2040 = dma.vmem_to_hbm [thread:$0]  %s2033, 8192, %s2035, [#allocation4], 128, 128, 8
    $region21: #{conv_layer_forward.1} parent=1 // pred_fallthru
      _
    // Predicated region
    $region22: #{conv_layer_forward.1} parent=1 // pred_check
      _
    $region23: #{conv_layer_forward.1} parent=1 // pred_check_branch
      %2042 = sbr.rel (0) target = $region25
    $region24: #{conv_layer_forward.1} parent=1 // pred_region
      %2044 = dma.done [#allocation4], 8192
    $region25: #{conv_layer_forward.1} parent=1 // pred_fallthru
      _
    %2045 = vsyncpa [#allocation4], 1

</llo_original>
